<compile_context>
chip_gen: v6e
topology: v6e:2x2x1
jax: 0.10.0
libtpu: 0.0.40
codegen_flags: <defaults>
</compile_context>

<pallas_src>
import jax
import jax.numpy as jnp
from jax.experimental import pallas as pl
from jax.experimental.pallas import tpu as pltpu


def _disc_kernel(x_ref, w1_ref, b1_ref, w2_ref, b2_ref, w3_ref, b3_ref,
                 o_ref, acc_ref):
    k = pl.program_id(1)

    # Zero the layer-1 accumulator at the start of each batch tile's reduction.
    @pl.when(k == 0)
    def _():
        acc_ref[...] = jnp.zeros_like(acc_ref)

    # Layer 1 partial product: bf16 x bf16 -> f32 accumulate on the MXU.
    acc_ref[...] += jnp.dot(x_ref[...], w1_ref[...],
                            preferred_element_type=jnp.float32)

    # On the last K step, finish layer 1 and run layers 2 and 3.
    @pl.when(k == pl.num_programs(1) - 1)
    def _():
        h1 = acc_ref[...] + b1_ref[...]                      # f32
        h1 = jnp.where(h1 > 0, h1, 0.2 * h1)                 # LeakyReLU(0.2)

        h2 = jnp.dot(h1.astype(jnp.bfloat16), w2_ref[...],
                     preferred_element_type=jnp.float32) + b2_ref[...]
        h2 = jnp.where(h2 > 0, h2, 0.2 * h2)

        out = jnp.dot(h2.astype(jnp.bfloat16), w3_ref[...],
                      preferred_element_type=jnp.float32) + b3_ref[...]
        o_ref[...] = out.astype(o_ref.dtype)


def discriminator_forward(img, params):
    """img: (B, C, H, W).  params: bf16 weights in (in, out) layout, f32 biases."""
    B = img.shape[0]
    # Matches torch .view(B, -1) for NCHW; cast matmul operand to bf16.
    x = img.reshape(B, -1).astype(jnp.bfloat16)
    in_features = x.shape[1]

    w1, b1 = params["w1"], params["b1"]
    w2, b2 = params["w2"], params["b2"]
    w3, b3 = params["w3"], params["b3"]
    H1 = w1.shape[1]          # 512
    H2 = w2.shape[1]          # 256
    n_out = w3.shape[1]       # 1

    # ---- Batch tiling: big tiles when possible, 8-row minimum otherwise. ----
    if B >= 256:
        tile_b = 256
    elif B >= 128:
        tile_b = 128
    else:
        tile_b = max(8, ((B + 7) // 8) * 8)
    b_pad = pl.cdiv(B, tile_b) * tile_b

    # ---- K tiling over in_features (layer-1 reduction). ----
    tile_k = 512 if in_features >= 512 else ((in_features + 127) // 128) * 128
    k_pad = pl.cdiv(in_features, tile_k) * tile_k

    # Zero padding (contributes nothing to the f32 accumulator).
    x_p = jnp.zeros((b_pad, k_pad), jnp.bfloat16).at[:B, :in_features].set(x)
    w1_p = jnp.zeros((k_pad, H1), w1.dtype).at[:in_features, :].set(w1)

    # Lane-dense output: pad the 1-wide final layer to 128 lanes.
    n_out_pad = 128
    w3_p = jnp.zeros((H2, n_out_pad), w3.dtype).at[:, :n_out].set(w3)
    b3_p = jnp.zeros((1, n_out_pad), b3.dtype).at[:, :n_out].set(b3)

    grid = (b_pad // tile_b, k_pad // tile_k)

    out = pl.pallas_call(
        _disc_kernel,
        out_shape=jax.ShapeDtypeStruct((b_pad, n_out_pad), jnp.float32),
        grid_spec=pltpu.PrefetchScalarGridSpec(
            num_scalar_prefetch=0,
            grid=grid,
            in_specs=[
                pl.BlockSpec((tile_b, tile_k), lambda i, k: (i, k)),   # x tile
                pl.BlockSpec((tile_k, H1), lambda i, k: (k, 0)),       # W1 tile
                pl.BlockSpec((1, H1), lambda i, k: (0, 0)),            # b1 (resident)
                pl.BlockSpec((H1, H2), lambda i, k: (0, 0)),           # W2 (resident)
                pl.BlockSpec((1, H2), lambda i, k: (0, 0)),            # b2 (resident)
                pl.BlockSpec((H2, n_out_pad), lambda i, k: (0, 0)),    # W3 (resident)
                pl.BlockSpec((1, n_out_pad), lambda i, k: (0, 0)),     # b3 (resident)
            ],
            out_specs=pl.BlockSpec((tile_b, n_out_pad), lambda i, k: (i, 0)),
            scratch_shapes=[pltpu.VMEM((tile_b, H1), jnp.float32)],    # layer-1 acc
        ),
        compiler_params=pltpu.CompilerParams(
            dimension_semantics=("parallel", "arbitrary"),
        ),
    )(x_p, w1_p, b1, w2, b2, w3_p, b3_p)

    return out[:B, :n_out]


def init_params(key, in_features, h1=512, h2=256, out=1):
    # Deterministic synthetic init (torch Linear-like uniform scale).
    ks = jax.random.split(key, 6)

    def lin(kw, kb, fan_in, fan_out):
        bound = 1.0 / jnp.sqrt(fan_in)
        w = jax.random.uniform(kw, (fan_in, fan_out), jnp.float32, -bound, bound)
        b = jax.random.uniform(kb, (1, fan_out), jnp.float32, -bound, bound)
        return w.astype(jnp.bfloat16), b   # bf16 matmul operands, f32 biases

    w1, b1 = lin(ks[0], ks[1], in_features, h1)
    w2, b2 = lin(ks[2], ks[3], h1, h2)
    w3, b3 = lin(ks[4], ks[5], h2, out)
    return {"w1": w1, "b1": b1, "w2": w2, "b2": b2, "w3": w3, "b3": b3}


def _reference(img, p):
    # Pure-JAX reference mirroring the kernel's precision policy
    # (bf16 operands, f32 accumulation / bias / activation).
    x = img.reshape(img.shape[0], -1).astype(jnp.bfloat16)
    h1 = jnp.dot(x, p["w1"], preferred_element_type=jnp.float32) + p["b1"]
    h1 = jnp.where(h1 > 0, h1, 0.2 * h1)
    h2 = jnp.dot(h1.astype(jnp.bfloat16), p["w2"],
                 preferred_element_type=jnp.float32) + p["b2"]
    h2 = jnp.where(h2 > 0, h2, 0.2 * h2)
    return jnp.dot(h2.astype(jnp.bfloat16), p["w3"],
                   preferred_element_type=jnp.float32) + p["b3"]


if __name__ == "__main__":
    key = jax.random.PRNGKey(0)
    k_img, k_param = jax.random.split(key)

    # Small synthetic img_shape = (4, 16, 16) -> 1024 input features, batch = 2.
    B, C, H, W = 2, 4, 16, 16
    img = jax.random.normal(k_img, (B, C, H, W), jnp.float32)
    params = init_params(k_param, C * H * W)

    out = discriminator_forward(img, params)
    out = jax.block_until_ready(out)

    ref = _reference(img, params)
    assert out.shape == (B, 1), out.shape
    assert jnp.allclose(out, ref, atol=1e-2, rtol=1e-2), (out, ref)

    print("KERNEL_OK")
</pallas_src>

<mosaic_0001>
module attributes {stable_mosaic.version = 11 : i64} {
  func.func @_disc_kernel(%arg0: i32, %arg1: i32, %arg2: memref<8x512xbf16, #tpu.memory_space<vmem>>, %arg3: memref<512x512xbf16, #tpu.memory_space<vmem>>, %arg4: memref<1x512xf32, #tpu.memory_space<vmem>>, %arg5: memref<512x256xbf16, #tpu.memory_space<vmem>>, %arg6: memref<1x256xf32, #tpu.memory_space<vmem>>, %arg7: memref<256x128xbf16, #tpu.memory_space<vmem>>, %arg8: memref<1x128xf32, #tpu.memory_space<vmem>>, %arg9: memref<8x128xf32, #tpu.memory_space<vmem>>, %arg10: memref<8x512xf32, #tpu.memory_space<vmem>>) attributes {dimension_semantics = [#tpu.dimension_semantics<parallel>, #tpu.dimension_semantics<arbitrary>], iteration_bounds = array<i64: 1, 2>, scalar_prefetch = 0 : i64, scratch_operands = 1 : i64, tpu.core_type = #tpu.core_type<tc>, window_params = [{transform_indices = @transform_0, window_bounds = array<i64: 8, 512>}, {transform_indices = @transform_1, window_bounds = array<i64: 512, 512>}, {pipeline_mode = #tpu.pipeline_mode<synchronous>, transform_indices = @transform_2, window_bounds = array<i64: 1, 512>}, {pipeline_mode = #tpu.pipeline_mode<synchronous>, transform_indices = @transform_3, window_bounds = array<i64: 512, 256>}, {pipeline_mode = #tpu.pipeline_mode<synchronous>, transform_indices = @transform_4, window_bounds = array<i64: 1, 256>}, {pipeline_mode = #tpu.pipeline_mode<synchronous>, transform_indices = @transform_5, window_bounds = array<i64: 256, 128>}, {pipeline_mode = #tpu.pipeline_mode<synchronous>, transform_indices = @transform_6, window_bounds = array<i64: 1, 128>}, {transform_indices = @transform_7, window_bounds = array<i64: 8, 128>}]} {
    %c0_i32 = arith.constant 0 : i32
    %0 = arith.cmpi eq, %arg1, %c0_i32 : i32
    %1 = arith.extui %0 : i1 to i32
    %c0_i32_0 = arith.constant 0 : i32
    %2 = arith.cmpi ne, %1, %c0_i32_0 : i32
    scf.if %2 {
      %cst_9 = arith.constant 0.000000e+00 : f32
      %12 = vector.broadcast %cst_9 : f32 to vector<8x512xf32>
      %c0_10 = arith.constant 0 : index
      %c0_11 = arith.constant 0 : index
      %13 = vector.load %arg10[%c0_10, %c0_11] : memref<8x512xf32, #tpu.memory_space<vmem>>, vector<8x512xf32>
      tpu.vector_store %arg10[%c0_10, %c0_11], %12 {strides = array<i32>} : memref<8x512xf32, #tpu.memory_space<vmem>>, vector<8x512xf32>,
    } else {
    }
    %c0 = arith.constant 0 : index
    %c0_1 = arith.constant 0 : index
    %3 = vector.load %arg10[%c0, %c0_1] : memref<8x512xf32, #tpu.memory_space<vmem>>, vector<8x512xf32>
    %c0_2 = arith.constant 0 : index
    %c0_3 = arith.constant 0 : index
    %4 = vector.load %arg2[%c0_2, %c0_3] : memref<8x512xbf16, #tpu.memory_space<vmem>>, vector<8x512xbf16>
    %c0_4 = arith.constant 0 : index
    %c0_5 = arith.constant 0 : index
    %5 = vector.load %arg3[%c0_4, %c0_5] : memref<512x512xbf16, #tpu.memory_space<vmem>>, vector<512x512xbf16>
    %cst = arith.constant dense<0.000000e+00> : vector<8x512xf32>
    %6 = tpu.matmul %4, %5, %cst {dimension_numbers = #tpu.dot_dimension_numbers<[1], [0], [0], [1], [0, 0, 1, 1], [], []>} : vector<8x512xbf16>, vector<512x512xbf16>, vector<8x512xf32> -> vector<8x512xf32>
    %7 = arith.addf %3, %6 : vector<8x512xf32>
    %c0_6 = arith.constant 0 : index
    %c0_7 = arith.constant 0 : index
    %8 = vector.load %arg10[%c0_6, %c0_7] : memref<8x512xf32, #tpu.memory_space<vmem>>, vector<8x512xf32>
    tpu.vector_store %arg10[%c0_6, %c0_7], %7 {strides = array<i32>} : memref<8x512xf32, #tpu.memory_space<vmem>>, vector<8x512xf32>,
    %c1_i32 = arith.constant 1 : i32
    %9 = arith.cmpi eq, %arg1, %c1_i32 : i32
    %10 = arith.extui %9 : i1 to i32
    %c0_i32_8 = arith.constant 0 : i32
    %11 = arith.cmpi ne, %10, %c0_i32_8 : i32
    scf.if %11 {
      %c0_9 = arith.constant 0 : index
      %c0_10 = arith.constant 0 : index
      %12 = vector.load %arg10[%c0_9, %c0_10] : memref<8x512xf32, #tpu.memory_space<vmem>>, vector<8x512xf32>
      %c0_11 = arith.constant 0 : index
      %c0_12 = arith.constant 0 : index
      %13 = vector.load %arg4[%c0_11, %c0_12] : memref<1x512xf32, #tpu.memory_space<vmem>>, vector<1x512xf32>
      %14 = vector.broadcast %13 : vector<1x512xf32> to vector<8x512xf32>
      %15 = arith.addf %12, %14 : vector<8x512xf32>
      %cst_13 = arith.constant 0.000000e+00 : f32
      %16 = vector.broadcast %cst_13 : f32 to vector<8x512xf32>
      %17 = arith.cmpf ogt, %15, %16 : vector<8x512xf32>
      %cst_14 = arith.constant 2.000000e-01 : f32
      %18 = vector.broadcast %cst_14 : f32 to vector<8x512xf32>
      %19 = arith.mulf %18, %15 : vector<8x512xf32>
      %20 = arith.select %17, %15, %19 : vector<8x512xi1>, vector<8x512xf32>
      %21 = arith.truncf %20 : vector<8x512xf32> to vector<8x512xbf16>
      %c0_15 = arith.constant 0 : index
      %c0_16 = arith.constant 0 : index
      %22 = vector.load %arg5[%c0_15, %c0_16] : memref<512x256xbf16, #tpu.memory_space<vmem>>, vector<512x256xbf16>
      %cst_17 = arith.constant dense<0.000000e+00> : vector<8x256xf32>
      %23 = tpu.matmul %21, %22, %cst_17 {dimension_numbers = #tpu.dot_dimension_numbers<[1], [0], [0], [1], [0, 0, 1, 1], [], []>} : vector<8x512xbf16>, vector<512x256xbf16>, vector<8x256xf32> -> vector<8x256xf32>
      %c0_18 = arith.constant 0 : index
      %c0_19 = arith.constant 0 : index
      %24 = vector.load %arg6[%c0_18, %c0_19] : memref<1x256xf32, #tpu.memory_space<vmem>>, vector<1x256xf32>
      %25 = vector.broadcast %24 : vector<1x256xf32> to vector<8x256xf32>
      %26 = arith.addf %23, %25 : vector<8x256xf32>
      %cst_20 = arith.constant 0.000000e+00 : f32
      %27 = vector.broadcast %cst_20 : f32 to vector<8x256xf32>
      %28 = arith.cmpf ogt, %26, %27 : vector<8x256xf32>
      %cst_21 = arith.constant 2.000000e-01 : f32
      %29 = vector.broadcast %cst_21 : f32 to vector<8x256xf32>
      %30 = arith.mulf %29, %26 : vector<8x256xf32>
      %31 = arith.select %28, %26, %30 : vector<8x256xi1>, vector<8x256xf32>
      %32 = arith.truncf %31 : vector<8x256xf32> to vector<8x256xbf16>
      %c0_22 = arith.constant 0 : index
      %c0_23 = arith.constant 0 : index
      %33 = vector.load %arg7[%c0_22, %c0_23] : memref<256x128xbf16, #tpu.memory_space<vmem>>, vector<256x128xbf16>
      %cst_24 = arith.constant dense<0.000000e+00> : vector<8x128xf32>
      %34 = tpu.matmul %32, %33, %cst_24 {dimension_numbers = #tpu.dot_dimension_numbers<[1], [0], [0], [1], [0, 0, 1, 1], [], []>} : vector<8x256xbf16>, vector<256x128xbf16>, vector<8x128xf32> -> vector<8x128xf32>
      %c0_25 = arith.constant 0 : index
      %c0_26 = arith.constant 0 : index
      %35 = vector.load %arg8[%c0_25, %c0_26] : memref<1x128xf32, #tpu.memory_space<vmem>>, vector<1x128xf32>
      %36 = vector.broadcast %35 : vector<1x128xf32> to vector<8x128xf32>
      %37 = arith.addf %34, %36 : vector<8x128xf32>
      %c0_27 = arith.constant 0 : index
      %c0_28 = arith.constant 0 : index
      %38 = vector.load %arg9[%c0_27, %c0_28] : memref<8x128xf32, #tpu.memory_space<vmem>>, vector<8x128xf32>
      tpu.vector_store %arg9[%c0_27, %c0_28], %37 {strides = array<i32>} : memref<8x128xf32, #tpu.memory_space<vmem>>, vector<8x128xf32>,
    } else {
    }
    return
  }
  func.func @transform_0(%arg0: i32, %arg1: i32) -> (i32, i32) {
    %c0_i32 = arith.constant 0 : i32
    return %arg0, %arg1 : i32, i32
  }
  func.func @transform_1(%arg0: i32, %arg1: i32) -> (i32, i32) {
    %c0_i32 = arith.constant 0 : i32
    %c0_i32_0 = arith.constant 0 : i32
    return %arg1, %c0_i32 : i32, i32
  }
  func.func @transform_2(%arg0: i32, %arg1: i32) -> (i32, i32) {
    %c0_i32 = arith.constant 0 : i32
    %c0_i32_0 = arith.constant 0 : i32
    %c0_i32_1 = arith.constant 0 : i32
    return %c0_i32, %c0_i32_0 : i32, i32
  }
  func.func @transform_3(%arg0: i32, %arg1: i32) -> (i32, i32) {
    %c0_i32 = arith.constant 0 : i32
    %c0_i32_0 = arith.constant 0 : i32
    %c0_i32_1 = arith.constant 0 : i32
    return %c0_i32, %c0_i32_0 : i32, i32
  }
  func.func @transform_4(%arg0: i32, %arg1: i32) -> (i32, i32) {
    %c0_i32 = arith.constant 0 : i32
    %c0_i32_0 = arith.constant 0 : i32
    %c0_i32_1 = arith.constant 0 : i32
    return %c0_i32, %c0_i32_0 : i32, i32
  }
  func.func @transform_5(%arg0: i32, %arg1: i32) -> (i32, i32) {
    %c0_i32 = arith.constant 0 : i32
    %c0_i32_0 = arith.constant 0 : i32
    %c0_i32_1 = arith.constant 0 : i32
    return %c0_i32, %c0_i32_0 : i32, i32
  }
  func.func @transform_6(%arg0: i32, %arg1: i32) -> (i32, i32) {
    %c0_i32 = arith.constant 0 : i32
    %c0_i32_0 = arith.constant 0 : i32
    %c0_i32_1 = arith.constant 0 : i32
    return %c0_i32, %c0_i32_0 : i32, i32
  }
  func.func @transform_7(%arg0: i32, %arg1: i32) -> (i32, i32) {
    %c0_i32 = arith.constant 0 : i32
    %c0_i32_0 = arith.constant 0 : i32
    return %arg0, %c0_i32 : i32, i32
  }
}

</mosaic_0001>

<llo_original>
// kernel: tpu_custom_call.1
$region0: #{tpu_custom_call.1}
  #allocation0 [shape = 'u32[]', space=smem, size = 0x4, offset = 0x4, fixed_abs, tag = 'smem constant byte address 0x4 - core index']
  #allocation1 [shape = 'u32[144,128]{1,0:T(1,128)}', space=vmem, size = 0x12000, scoped, tag = 'internal scratch']
  #allocation2 [shape = 'f32[8,512]{1,0:T(8,128)}', space=vmem, size = 0x4000, scoped, tag = 'scratch operand']
  %s0 = inlined_call_operand.hbm [shape: bf16[8,1024], index: 0, kind: input, shape index: {}]
  %s1 = inlined_call_operand.hbm [shape: bf16[1024,512], index: 1, kind: input, shape index: {}]
  %s2 = inlined_call_operand.hbm [shape: f32[1,512], index: 2, kind: input, shape index: {}]
  %s3 = inlined_call_operand.hbm [shape: bf16[512,256], index: 3, kind: input, shape index: {}]
  %s4 = inlined_call_operand.vmem [shape: f32[1,256], index: 4, kind: input, shape index: {}]
  %s5 = inlined_call_operand.hbm [shape: bf16[256,128], index: 5, kind: input, shape index: {}]
  %s6 = inlined_call_operand.vmem [shape: f32[1,128], index: 6, kind: input, shape index: {}]
  %s7 = inlined_call_operand.hbm [shape: f32[8,128], index: 7, kind: output, shape index: {}]
  %s8 = sld [smem:[#allocation0]]
  $region89: #{tpu_custom_call.1} parent=0
    _
  %s10 = ssub.s32 1, %s8
  %s11 = scalar_select 0, %s10, %s8
  $region1: #{tpu_custom_call.1} parent=0
    #allocation3 [shape = 'u8[16384]{0}', space=vmem, size = 0x4000, scoped, tag = 'input window, operand 0']
    #allocation4 [shape = 's32[2]{0}', space=sflag, size = 0x8, scoped, tag = 'scoped memory for tpu_custom_call.1']
    #allocation5 [shape = 's32[2]{0}', space=sflag, size = 0x8, scoped, tag = 'scoped memory for tpu_custom_call.1']
    #allocation6 [shape = 'u8[1048576]{0}', space=vmem, size = 0x100000, scoped, tag = 'input window, operand 1']
    #allocation7 [shape = 's32[2]{0}', space=sflag, size = 0x8, scoped, tag = 'scoped memory for tpu_custom_call.1']
    #allocation8 [shape = 'u8[2048]{0}', space=vmem, size = 0x800, scoped, tag = 'input window, operand 2, single buffered']
    #allocation9 [shape = 'u8[262144]{0}', space=vmem, size = 0x40000, scoped, tag = 'input window, operand 3, single buffered']
    #allocation10 [shape = 's32[1]{0}', space=sflag, size = 0x4, scoped, tag = 'scoped memory for tpu_custom_call.1']
    #allocation11 [shape = 'u8[65536]{0}', space=vmem, size = 0x10000, scoped, tag = 'input window, operand 5, single buffered']
    #allocation12 [shape = 'u8[4096]{0}', space=vmem, size = 0x1000, scoped, tag = 'output window, operand 0, single buffered']
    %12 = vsyncpa [#allocation4], 0
    %s13 = scalar_lea.sflag [#allocation4], 1
    %14 = vsyncpa %s13, 0
    %15 = vsyncpa [#allocation7], 0
    %s16 = scalar_lea.sflag [#allocation7], 1
    %17 = vsyncpa %s16, 0
    %18 = vsyncpa [#allocation10], 0
    %19 = vsyncpa [#allocation5], 0
    loop: start=0, step=1, limit=4
    $region2: #{tpu_custom_call.1} parent=1 // loop_pre_header
      _
    $region3: #{tpu_custom_call.1} parent=1 // loop_header
      %s21 = sphi 0, %s25
      %p22 = scmp.ge.s32.totalorder %s21, 4
      %s28 = sphi 0, %s40
      %s29 = sphi 0, %s36
      %s30 = sphi 0, %s28
      %s31 = sphi 0, %s29
      %s32 = sphi 0, %s30
      %s33 = sphi 0, %s31
      %s45 = sphi 0, %s47
      %s48 = sphi 0, %s45
      %s49 = sphi 0, %s48
      %s65 = sphi 0, %s49
      %s71 = sphi 0, %s73
      %s74 = sphi 0, %s71
      %s75 = sphi 0, %s74
      %s91 = sphi 0, %s75
      %s95 = sphi 0, %s95
      %s97 = sphi 0, %s95
      %s98 = sphi 0, %s97
      %s112 = sphi 0, %s98
      %s116 = sphi 0, %s116
      %s118 = sphi 0, %s116
      %s119 = sphi 0, %s118
      %s133 = sphi 0, %s119
      %s137 = sphi 0, %s137
      %s139 = sphi 0, %s137
      %s140 = sphi 0, %s139
      %s154 = sphi 0, %s140
      %s158 = sphi 0, %s158
      %s160 = sphi 0, %s158
      %s161 = sphi 0, %s160
      %s175 = sphi 0, %s161
      %s179 = sphi 0, %s179
      %s181 = sphi 0, %s179
      %s182 = sphi 0, %s181
      %s196 = sphi 0, %s182
      %s202 = sphi 0, %s204
      %s205 = sphi 0, %s202
      %s206 = sphi 0, %s205
      %s222 = sphi 0, %s206
    $region4: #{tpu_custom_call.1} parent=1 // loop_header_branch
      %24 = sbr.rel (%p22) target = $region8
    $region5: #{tpu_custom_call.1} parent=1 // loop_body
      %s26 = ssub.s32 %s21, 1
      %s27 = ssub.s32 %s21, 2
      %s34 = sadd.s32 1, %s29
      %p35 = scmp.ge.s32.totalorder %s34, 2
      %s36 = scalar_select %p35, 0, %s34
      %s37 = sadd.s32 1, %s28
      %s38 = scalar_select %p35, %s37, %s28
      %p39 = scmp.ge.s32.totalorder %s38, 1
      %s40 = scalar_select %p39, 0, %s38
      %s41 = ssub.s32 %s28, %s40
      %s42 = ssub.s32 %s29, %s36
      %s43 = sor.u32 %s41, %s42
      %p44 = scmp.eq.s32.totalorder %s43, 0
      %s46 = sadd.s32 %s45, 1
      %s47 = scalar_select %p44, %s45, %s46
      %p50 = pneg %p44
      %p51 = scmp.eq.s32.totalorder %s21, 1
      %p52 = por %p50, %p51
      %p53 = scmp.ne.s32.totalorder %s45, %s48
      %p54 = scmp.eq.s32.totalorder %s21, 0
      %p55 = por %p53, %p54
      %p56 = scmp.ne.s32.totalorder %s45, %s48
      %p57 = scmp.eq.s32.totalorder %s26, 1
      %p58 = por %p56, %p57
      %p59 = scmp.ne.s32.totalorder %s48, %s49
      %p60 = scmp.eq.s32.totalorder %s26, 0
      %p61 = por %p59, %p60
      %p62 = scmp.ne.s32.totalorder %s48, %s49
      %p63 = scmp.eq.s32.totalorder %s27, 1
      %p64 = por %p62, %p63
      %p66 = scmp.ne.s32.totalorder %s49, %s65
      %p67 = scmp.eq.s32.totalorder %s27, 0
      %p68 = por %p66, %p67
      %s69 = ssub.s32 %s29, %s36
      %p70 = scmp.eq.s32.totalorder %s69, 0
      %s72 = sadd.s32 %s71, 1
      %s73 = scalar_select %p70, %s71, %s72
      %p76 = pneg %p70
      %p77 = scmp.eq.s32.totalorder %s21, 1
      %p78 = por %p76, %p77
      %p79 = scmp.ne.s32.totalorder %s71, %s74
      %p80 = scmp.eq.s32.totalorder %s21, 0
      %p81 = por %p79, %p80
      %p82 = scmp.ne.s32.totalorder %s71, %s74
      %p83 = scmp.eq.s32.totalorder %s26, 1
      %p84 = por %p82, %p83
      %p85 = scmp.ne.s32.totalorder %s74, %s75
      %p86 = scmp.eq.s32.totalorder %s26, 0
      %p87 = por %p85, %p86
      %p88 = scmp.ne.s32.totalorder %s74, %s75
      %p89 = scmp.eq.s32.totalorder %s27, 1
      %p90 = por %p88, %p89
      %p92 = scmp.ne.s32.totalorder %s75, %s91
      %p93 = scmp.eq.s32.totalorder %s27, 0
      %p94 = por %p92, %p93
      %s96 = sadd.s32 %s95, 1
      %p99 = scmp.eq.s32.totalorder %s21, 1
      %p100 = scmp.ne.s32.totalorder %s95, %s97
      %p101 = scmp.eq.s32.totalorder %s21, 0
      %p102 = por %p100, %p101
      %p103 = scmp.ne.s32.totalorder %s95, %s97
      %p104 = scmp.eq.s32.totalorder %s26, 1
      %p105 = por %p103, %p104
      %p106 = scmp.ne.s32.totalorder %s97, %s98
      %p107 = scmp.eq.s32.totalorder %s26, 0
      %p108 = por %p106, %p107
      %p109 = scmp.ne.s32.totalorder %s97, %s98
      %p110 = scmp.eq.s32.totalorder %s27, 1
      %p111 = por %p109, %p110
      %p113 = scmp.ne.s32.totalorder %s98, %s112
      %p114 = scmp.eq.s32.totalorder %s27, 0
      %p115 = por %p113, %p114
      %s117 = sadd.s32 %s116, 1
      %p120 = scmp.eq.s32.totalorder %s21, 1
      %p121 = scmp.ne.s32.totalorder %s116, %s118
      %p122 = scmp.eq.s32.totalorder %s21, 0
      %p123 = por %p121, %p122
      %p124 = scmp.ne.s32.totalorder %s116, %s118
      %p125 = scmp.eq.s32.totalorder %s26, 1
      %p126 = por %p124, %p125
      %p127 = scmp.ne.s32.totalorder %s118, %s119
      %p128 = scmp.eq.s32.totalorder %s26, 0
      %p129 = por %p127, %p128
      %p130 = scmp.ne.s32.totalorder %s118, %s119
      %p131 = scmp.eq.s32.totalorder %s27, 1
      %p132 = por %p130, %p131
      %p134 = scmp.ne.s32.totalorder %s119, %s133
      %p135 = scmp.eq.s32.totalorder %s27, 0
      %p136 = por %p134, %p135
      %s138 = sadd.s32 %s137, 1
      %p141 = scmp.eq.s32.totalorder %s21, 1
      %p142 = scmp.ne.s32.totalorder %s137, %s139
      %p143 = scmp.eq.s32.totalorder %s21, 0
      %p144 = por %p142, %p143
      %p145 = scmp.ne.s32.totalorder %s137, %s139
      %p146 = scmp.eq.s32.totalorder %s26, 1
      %p147 = por %p145, %p146
      %p148 = scmp.ne.s32.totalorder %s139, %s140
      %p149 = scmp.eq.s32.totalorder %s26, 0
      %p150 = por %p148, %p149
      %p151 = scmp.ne.s32.totalorder %s139, %s140
      %p152 = scmp.eq.s32.totalorder %s27, 1
      %p153 = por %p151, %p152
      %p155 = scmp.ne.s32.totalorder %s140, %s154
      %p156 = scmp.eq.s32.totalorder %s27, 0
      %p157 = por %p155, %p156
      %s159 = sadd.s32 %s158, 1
      %p162 = scmp.eq.s32.totalorder %s21, 1
      %p163 = scmp.ne.s32.totalorder %s158, %s160
      %p164 = scmp.eq.s32.totalorder %s21, 0
      %p165 = por %p163, %p164
      %p166 = scmp.ne.s32.totalorder %s158, %s160
      %p167 = scmp.eq.s32.totalorder %s26, 1
      %p168 = por %p166, %p167
      %p169 = scmp.ne.s32.totalorder %s160, %s161
      %p170 = scmp.eq.s32.totalorder %s26, 0
      %p171 = por %p169, %p170
      %p172 = scmp.ne.s32.totalorder %s160, %s161
      %p173 = scmp.eq.s32.totalorder %s27, 1
      %p174 = por %p172, %p173
      %p176 = scmp.ne.s32.totalorder %s161, %s175
      %p177 = scmp.eq.s32.totalorder %s27, 0
      %p178 = por %p176, %p177
      %s180 = sadd.s32 %s179, 1
      %p183 = scmp.eq.s32.totalorder %s21, 1
      %p184 = scmp.ne.s32.totalorder %s179, %s181
      %p185 = scmp.eq.s32.totalorder %s21, 0
      %p186 = por %p184, %p185
      %p187 = scmp.ne.s32.totalorder %s179, %s181
      %p188 = scmp.eq.s32.totalorder %s26, 1
      %p189 = por %p187, %p188
      %p190 = scmp.ne.s32.totalorder %s181, %s182
      %p191 = scmp.eq.s32.totalorder %s26, 0
      %p192 = por %p190, %p191
      %p193 = scmp.ne.s32.totalorder %s181, %s182
      %p194 = scmp.eq.s32.totalorder %s27, 1
      %p195 = por %p193, %p194
      %p197 = scmp.ne.s32.totalorder %s182, %s196
      %p198 = scmp.eq.s32.totalorder %s27, 0
      %p199 = por %p197, %p198
      %s200 = ssub.s32 %s28, %s40
      %p201 = scmp.eq.s32.totalorder %s200, 0
      %s203 = sadd.s32 %s202, 1
      %s204 = scalar_select %p201, %s202, %s203
      %p207 = pneg %p201
      %p208 = scmp.eq.s32.totalorder %s21, 1
      %p209 = por %p207, %p208
      %p210 = scmp.ne.s32.totalorder %s202, %s205
      %p211 = scmp.eq.s32.totalorder %s21, 0
      %p212 = por %p210, %p211
      %p213 = scmp.ne.s32.totalorder %s202, %s205
      %p214 = scmp.eq.s32.totalorder %s26, 1
      %p215 = por %p213, %p214
      %p216 = scmp.ne.s32.totalorder %s205, %s206
      %p217 = scmp.eq.s32.totalorder %s26, 0
      %p218 = por %p216, %p217
      %p219 = scmp.ne.s32.totalorder %s205, %s206
      %p220 = scmp.eq.s32.totalorder %s27, 1
      %p221 = por %p219, %p220
      %p223 = scmp.ne.s32.totalorder %s206, %s222
      %p224 = scmp.eq.s32.totalorder %s27, 0
      %p225 = por %p223, %p224
      %p226 = scmp.le.s32.totalorder 1, %s21
      %p227 = scmp.lt.s32.totalorder %s21, 3
      %p228 = pnand %p226, %p227
      %p229 = pneg %p228
      // Predicated region
      $region9: #{tpu_custom_call.1} parent=5 // pred_check
        _
      $region10: #{tpu_custom_call.1} parent=5 // pred_check_branch
        %231 = sbr.rel (%p228) target = $region12
      $region11: #{tpu_custom_call.1} parent=5 // pred_region
        %s232 = ssub.s32 %s21, 1
        // Predicated region
        $region13: #{tpu_custom_call.1} parent=11 // pred_check
          %p233 = pneg %p108
        $region14: #{tpu_custom_call.1} parent=11 // pred_check_branch
          %235 = sbr.rel (%p233) target = $region16
        $region15: #{tpu_custom_call.1} parent=11 // pred_region
          %s237 = ssub.s32 64, 64
          %238 = vsyncadd [#allocation7], %s237
          %s240 = sshll.u32 [#allocation8], 4
          %s241 = int_to_ptr.vmem [resolvable:$true] %s240
          %243 = dma.hbm_to_vmem [thread:$0]  %s2, 64, %s241, [#allocation7]
        $region16: #{tpu_custom_call.1} parent=11 // pred_fallthru
          _
        // Predicated region
        $region17: #{tpu_custom_call.1} parent=11 // pred_check
          %p244 = pneg %p129
        $region18: #{tpu_custom_call.1} parent=11 // pred_check_branch
          %246 = sbr.rel (%p244) target = $region20
        $region19: #{tpu_custom_call.1} parent=11 // pred_region
          %s248 = ssub.s32 8192, 8192
          %249 = vsyncadd [#allocation10], %s248
          %s250 = sshll.u32 [#allocation9], 4
          %s251 = int_to_ptr.vmem [resolvable:$true] %s250
          %256 = dma.hbm_to_vmem [thread:$0]  %s3, 8192, %s251, [#allocation10], 128, 128, 8
        $region20: #{tpu_custom_call.1} parent=11 // pred_fallthru
          _
        // Predicated region
        $region21: #{tpu_custom_call.1} parent=11 // pred_check
          %p257 = pneg %p150
        $region22: #{tpu_custom_call.1} parent=11 // pred_check_branch
          %259 = sbr.rel (%p257) target = $region24
        $region23: #{tpu_custom_call.1} parent=11 // pred_region
          _
        $region24: #{tpu_custom_call.1} parent=11 // pred_fallthru
          _
        // Predicated region
        $region25: #{tpu_custom_call.1} parent=11 // pred_check
          %p260 = pneg %p171
        $region26: #{tpu_custom_call.1} parent=11 // pred_check_branch
          %262 = sbr.rel (%p260) target = $region28
        $region27: #{tpu_custom_call.1} parent=11 // pred_region
          %s264 = ssub.s32 2048, 2048
          %265 = vsyncadd [#allocation10], %s264
          %s266 = sshll.u32 [#allocation11], 4
          %s267 = int_to_ptr.vmem [resolvable:$true] %s266
          %272 = dma.hbm_to_vmem [thread:$0]  %s5, 2048, %s267, [#allocation10], 64, 64, 4
        $region28: #{tpu_custom_call.1} parent=11 // pred_fallthru
          _
        // Predicated region
        $region29: #{tpu_custom_call.1} parent=11 // pred_check
          %p273 = pneg %p192
        $region30: #{tpu_custom_call.1} parent=11 // pred_check_branch
          %275 = sbr.rel (%p273) target = $region32
        $region31: #{tpu_custom_call.1} parent=11 // pred_region
          _
        $region32: #{tpu_custom_call.1} parent=11 // pred_fallthru
          _
      $region12: #{tpu_custom_call.1} parent=5 // pred_fallthru
        _
      %p276 = scmp.lt.s32.totalorder %s21, 2
      // Predicated region
      $region33: #{tpu_custom_call.1} parent=5 // pred_check
        %p277 = pneg %p276
      $region34: #{tpu_custom_call.1} parent=5 // pred_check_branch
        %279 = sbr.rel (%p277) target = $region36
      $region35: #{tpu_custom_call.1} parent=5 // pred_region
        // Predicated region
        $region37: #{tpu_custom_call.1} parent=35 // pred_check
          %p280 = pneg %p55
        $region38: #{tpu_custom_call.1} parent=35 // pred_check_branch
          %282 = sbr.rel (%p280) target = $region40
        $region39: #{tpu_custom_call.1} parent=35 // pred_region
          %s283 = sand.u32 %s45, 1
          %s284 = scalar_lea.sflag [#allocation4], %s283
          %s285 = sand.u32 %s45, 1
          %s286 = smul.addr %s285, 16
          %s287 = scalar_lea.vmem [#allocation3], %s286
          %s288 = smul.u32 4, %s29
          %s290 = ssub.s32 256, 256
          %291 = vsyncadd %s284, %s290
          %s292 = smul.addr %s28, 8
          %s293 = sadd.s32 %s288, %s292
          %s294 = smul.addr %s293, 64
          %s295 = scalar_lea.hbm %s0, %s294
          %s297 = sshll.u32 %s287, 4
          %s298 = int_to_ptr.vmem [resolvable:$true] %s297
          %300 = dma.hbm_to_vmem [thread:$0]  %s295, 256, %s298, %s284
        $region40: #{tpu_custom_call.1} parent=35 // pred_fallthru
          _
        // Predicated region
        $region41: #{tpu_custom_call.1} parent=35 // pred_check
          %p301 = pneg %p81
        $region42: #{tpu_custom_call.1} parent=35 // pred_check_branch
          %303 = sbr.rel (%p301) target = $region44
        $region43: #{tpu_custom_call.1} parent=35 // pred_region
          %s304 = sand.u32 %s21, 1
          %s305 = scalar_lea.sflag [#allocation7], %s304
          %s306 = sand.u32 %s71, 1
          %s307 = smul.addr %s306, 1024
          %s308 = scalar_lea.vmem [#allocation6], %s307
          %s309 = smul.u32 64, %s29
          %s311 = ssub.s32 16384, 16384
          %312 = vsyncadd %s305, %s311
          %s313 = smul.addr %s309, 4
          %s314 = smul.addr %s313, 64
          %s315 = scalar_lea.hbm %s1, %s314
          %s316 = sshll.u32 %s308, 4
          %s317 = int_to_ptr.vmem [resolvable:$true] %s316
          %322 = dma.hbm_to_vmem [thread:$0]  %s315, 16384, %s317, %s305, 256, 256, 16
        $region44: #{tpu_custom_call.1} parent=35 // pred_fallthru
          _
      $region36: #{tpu_custom_call.1} parent=5 // pred_fallthru
        _
      %p323 = scmp.le.s32.totalorder 1, %s21
      %p324 = scmp.lt.s32.totalorder %s21, 3
      %p325 = pnand %p323, %p324
      %p326 = pneg %p325
      // Predicated region
      $region45: #{tpu_custom_call.1} parent=5 // pred_check
        _
      $region46: #{tpu_custom_call.1} parent=5 // pred_check_branch
        %328 = sbr.rel (%p325) target = $region48
      $region47: #{tpu_custom_call.1} parent=5 // pred_region
        %s329 = ssub.s32 %s21, 1
        %s330 = sand.u32 %s48, 1
        %s331 = scalar_lea.sflag [#allocation4], %s330
        %s332 = sand.u32 %s48, 1
        %s333 = smul.addr %s332, 16
        %s334 = scalar_lea.vmem [#allocation3], %s333
        // Predicated region
        $region49: #{tpu_custom_call.1} parent=47 // pred_check
          %p335 = pneg %p61
        $region50: #{tpu_custom_call.1} parent=47 // pred_check_branch
          %337 = sbr.rel (%p335) target = $region52
        $region51: #{tpu_custom_call.1} parent=47 // pred_region
          %338 = dma.done %s331, 256
        $region52: #{tpu_custom_call.1} parent=47 // pred_fallthru
          _
        %s339 = sand.u32 %s26, 1
        %s340 = scalar_lea.sflag [#allocation7], %s339
        %s341 = sand.u32 %s74, 1
        %s342 = smul.addr %s341, 1024
        %s343 = scalar_lea.vmem [#allocation6], %s342
        // Predicated region
        $region53: #{tpu_custom_call.1} parent=47 // pred_check
          %p344 = pneg %p87
        $region54: #{tpu_custom_call.1} parent=47 // pred_check_branch
          %346 = sbr.rel (%p344) target = $region56
        $region55: #{tpu_custom_call.1} parent=47 // pred_region
          %347 = dma.done %s340, 16384
        $region56: #{tpu_custom_call.1} parent=47 // pred_fallthru
          _
        // Predicated region
        $region57: #{tpu_custom_call.1} parent=47 // pred_check
          %p348 = pneg %p108
        $region58: #{tpu_custom_call.1} parent=47 // pred_check_branch
          %350 = sbr.rel (%p348) target = $region60
        $region59: #{tpu_custom_call.1} parent=47 // pred_region
          %351 = dma.done [#allocation7], 64
        $region60: #{tpu_custom_call.1} parent=47 // pred_fallthru
          _
        // Predicated region
        $region61: #{tpu_custom_call.1} parent=47 // pred_check
          %p352 = pneg %p129
        $region62: #{tpu_custom_call.1} parent=47 // pred_check_branch
          %354 = sbr.rel (%p352) target = $region64
        $region63: #{tpu_custom_call.1} parent=47 // pred_region
          %355 = dma.done [#allocation10], 8192
        $region64: #{tpu_custom_call.1} parent=47 // pred_fallthru
          _
        // Predicated region
        $region65: #{tpu_custom_call.1} parent=47 // pred_check
          %p356 = pneg %p171
        $region66: #{tpu_custom_call.1} parent=47 // pred_check_branch
          %358 = sbr.rel (%p356) target = $region68
        $region67: #{tpu_custom_call.1} parent=47 // pred_region
          %359 = dma.done [#allocation10], 2048
        $region68: #{tpu_custom_call.1} parent=47 // pred_fallthru
          _
        %s360 = sand.u32 %s48, 1
        %s361 = scalar_lea.sflag [#allocation4], %s360
        %s362 = sand.u32 %s48, 1
        %s363 = smul.addr %s362, 16
        %s364 = scalar_lea.vmem [#allocation3], %s363
        %p365 = pneg %p61
        %p366 = pneg %p58
        %s367 = sand.u32 %s26, 1
        %s368 = scalar_lea.sflag [#allocation7], %s367
        %s369 = sand.u32 %s74, 1
        %s370 = smul.addr %s369, 1024
        %s371 = scalar_lea.vmem [#allocation6], %s370
        %p372 = pneg %p87
        %p373 = pneg %p84
        %p374 = pneg %p108
        %p375 = pneg %p105
        %p376 = pneg %p129
        %p377 = pneg %p126
        %p378 = pneg %p150
        %p379 = pneg %p147
        %p380 = pneg %p171
        %p381 = pneg %p168
        %p382 = pneg %p192
        %p383 = pneg %p189
        %p384 = pneg %p218
        %p385 = pneg %p215
        %s386 = smul.u32 4, %s31
        %s387 = smul.u32 64, %s31
        %p389 = scmp.eq.s32.totalorder %s31, 0
        // Predicated region
        $region69: #{tpu_custom_call.1} parent=47 // pred_check
          %p390 = pneg %p389
        $region70: #{tpu_custom_call.1} parent=47 // pred_check_branch
          %392 = sbr.rel (%p390) target = $region72
        $region71: #{tpu_custom_call.1} parent=47 // pred_region
          %393 = vst [vmem:[#allocation2] sm:$0xff] 0.0
          %394 = vst [vmem:[#allocation2 + $0x8] sm:$0xff] 0.0
          %395 = vst [vmem:[#allocation2 + $0x10] sm:$0xff] 0.0
          %396 = vst [vmem:[#allocation2 + $0x18] sm:$0xff] 0.0
        $region72: #{tpu_custom_call.1} parent=47 // pred_fallthru
          _
        %v397 = vld [vmem:[#allocation2] sm:$0xff]
        %v398 = vld [vmem:[#allocation2 + $0x8] sm:$0xff]
        %v399 = vld [vmem:[#allocation2 + $0x10] sm:$0xff]
        %v400 = vld [vmem:[#allocation2 + $0x18] sm:$0xff]
        %v401 = vld [vmem:[%s334] sm:$0xff]
        %v402 = vld [vmem:[%s334 + $0x8] sm:$0xff]
        %v403 = vld [vmem:[%s343] sm:$0xff]
        %v404 = vld [vmem:[%s343 + $0x8] sm:$0xff]
        %v405 = vld [vmem:[%s343 + $0x10] sm:$0xff]
        %v406 = vld [vmem:[%s343 + $0x18] sm:$0xff]
        %v407 = vld [vmem:[%s343 + $0x20] sm:$0xff]
        %v408 = vld [vmem:[%s343 + $0x28] sm:$0xff]
        %v409 = vld [vmem:[%s343 + $0x30] sm:$0xff]
        %v410 = vld [vmem:[%s343 + $0x38] sm:$0xff]
        %v411 = vld [vmem:[%s343 + $0x40] sm:$0xff]
        %v412 = vld [vmem:[%s343 + $0x48] sm:$0xff]
        %v413 = vld [vmem:[%s343 + $0x50] sm:$0xff]
        %v414 = vld [vmem:[%s343 + $0x58] sm:$0xff]
        %v415 = vld [vmem:[%s343 + $0x60] sm:$0xff]
        %v416 = vld [vmem:[%s343 + $0x68] sm:$0xff]
        %v417 = vld [vmem:[%s343 + $0x70] sm:$0xff]
        %v418 = vld [vmem:[%s343 + $0x78] sm:$0xff]
        %v419 = vld [vmem:[%s343 + $0x80] sm:$0xff]
        %v420 = vld [vmem:[%s343 + $0x88] sm:$0xff]
        %v421 = vld [vmem:[%s343 + $0x90] sm:$0xff]
        %v422 = vld [vmem:[%s343 + $0x98] sm:$0xff]
        %v423 = vld [vmem:[%s343 + $0xa0] sm:$0xff]
        %v424 = vld [vmem:[%s343 + $0xa8] sm:$0xff]
        %v425 = vld [vmem:[%s343 + $0xb0] sm:$0xff]
        %v426 = vld [vmem:[%s343 + $0xb8] sm:$0xff]
        %v427 = vld [vmem:[%s343 + $0xc0] sm:$0xff]
        %v428 = vld [vmem:[%s343 + $0xc8] sm:$0xff]
        %v429 = vld [vmem:[%s343 + $0xd0] sm:$0xff]
        %v430 = vld [vmem:[%s343 + $0xd8] sm:$0xff]
        %v431 = vld [vmem:[%s343 + $0xe0] sm:$0xff]
        %v432 = vld [vmem:[%s343 + $0xe8] sm:$0xff]
        %v433 = vld [vmem:[%s343 + $0xf0] sm:$0xff]
        %v434 = vld [vmem:[%s343 + $0xf8] sm:$0xff]
        %v435 = vld [vmem:[%s343 + $0x100] sm:$0xff]
        %v436 = vld [vmem:[%s343 + $0x108] sm:$0xff]
        %v437 = vld [vmem:[%s343 + $0x110] sm:$0xff]
        %v438 = vld [vmem:[%s343 + $0x118] sm:$0xff]
        %v439 = vld [vmem:[%s343 + $0x120] sm:$0xff]
        %v440 = vld [vmem:[%s343 + $0x128] sm:$0xff]
        %v441 = vld [vmem:[%s343 + $0x130] sm:$0xff]
        %v442 = vld [vmem:[%s343 + $0x138] sm:$0xff]
        %v443 = vld [vmem:[%s343 + $0x140] sm:$0xff]
        %v444 = vld [vmem:[%s343 + $0x148] sm:$0xff]
        %v445 = vld [vmem:[%s343 + $0x150] sm:$0xff]
        %v446 = vld [vmem:[%s343 + $0x158] sm:$0xff]
        %v447 = vld [vmem:[%s343 + $0x160] sm:$0xff]
        %v448 = vld [vmem:[%s343 + $0x168] sm:$0xff]
        %v449 = vld [vmem:[%s343 + $0x170] sm:$0xff]
        %v450 = vld [vmem:[%s343 + $0x178] sm:$0xff]
        %v451 = vld [vmem:[%s343 + $0x180] sm:$0xff]
        %v452 = vld [vmem:[%s343 + $0x188] sm:$0xff]
        %v453 = vld [vmem:[%s343 + $0x190] sm:$0xff]
        %v454 = vld [vmem:[%s343 + $0x198] sm:$0xff]
        %v455 = vld [vmem:[%s343 + $0x1a0] sm:$0xff]
        %v456 = vld [vmem:[%s343 + $0x1a8] sm:$0xff]
        %v457 = vld [vmem:[%s343 + $0x1b0] sm:$0xff]
        %v458 = vld [vmem:[%s343 + $0x1b8] sm:$0xff]
        %v459 = vld [vmem:[%s343 + $0x1c0] sm:$0xff]
        %v460 = vld [vmem:[%s343 + $0x1c8] sm:$0xff]
        %v461 = vld [vmem:[%s343 + $0x1d0] sm:$0xff]
        %v462 = vld [vmem:[%s343 + $0x1d8] sm:$0xff]
        %v463 = vld [vmem:[%s343 + $0x1e0] sm:$0xff]
        %v464 = vld [vmem:[%s343 + $0x1e8] sm:$0xff]
        %v465 = vld [vmem:[%s343 + $0x1f0] sm:$0xff]
        %v466 = vld [vmem:[%s343 + $0x1f8] sm:$0xff]
        %v467 = vld [vmem:[%s343 + $0x200] sm:$0xff]
        %v468 = vld [vmem:[%s343 + $0x208] sm:$0xff]
        %v469 = vld [vmem:[%s343 + $0x210] sm:$0xff]
        %v470 = vld [vmem:[%s343 + $0x218] sm:$0xff]
        %v471 = vld [vmem:[%s343 + $0x220] sm:$0xff]
        %v472 = vld [vmem:[%s343 + $0x228] sm:$0xff]
        %v473 = vld [vmem:[%s343 + $0x230] sm:$0xff]
        %v474 = vld [vmem:[%s343 + $0x238] sm:$0xff]
        %v475 = vld [vmem:[%s343 + $0x240] sm:$0xff]
        %v476 = vld [vmem:[%s343 + $0x248] sm:$0xff]
        %v477 = vld [vmem:[%s343 + $0x250] sm:$0xff]
        %v478 = vld [vmem:[%s343 + $0x258] sm:$0xff]
        %v479 = vld [vmem:[%s343 + $0x260] sm:$0xff]
        %v480 = vld [vmem:[%s343 + $0x268] sm:$0xff]
        %v481 = vld [vmem:[%s343 + $0x270] sm:$0xff]
        %v482 = vld [vmem:[%s343 + $0x278] sm:$0xff]
        %v483 = vld [vmem:[%s343 + $0x280] sm:$0xff]
        %v484 = vld [vmem:[%s343 + $0x288] sm:$0xff]
        %v485 = vld [vmem:[%s343 + $0x290] sm:$0xff]
        %v486 = vld [vmem:[%s343 + $0x298] sm:$0xff]
        %v487 = vld [vmem:[%s343 + $0x2a0] sm:$0xff]
        %v488 = vld [vmem:[%s343 + $0x2a8] sm:$0xff]
        %v489 = vld [vmem:[%s343 + $0x2b0] sm:$0xff]
        %v490 = vld [vmem:[%s343 + $0x2b8] sm:$0xff]
        %v491 = vld [vmem:[%s343 + $0x2c0] sm:$0xff]
        %v492 = vld [vmem:[%s343 + $0x2c8] sm:$0xff]
        %v493 = vld [vmem:[%s343 + $0x2d0] sm:$0xff]
        %v494 = vld [vmem:[%s343 + $0x2d8] sm:$0xff]
        %v495 = vld [vmem:[%s343 + $0x2e0] sm:$0xff]
        %v496 = vld [vmem:[%s343 + $0x2e8] sm:$0xff]
        %v497 = vld [vmem:[%s343 + $0x2f0] sm:$0xff]
        %v498 = vld [vmem:[%s343 + $0x2f8] sm:$0xff]
        %v499 = vld [vmem:[%s343 + $0x300] sm:$0xff]
        %v500 = vld [vmem:[%s343 + $0x308] sm:$0xff]
        %v501 = vld [vmem:[%s343 + $0x310] sm:$0xff]
        %v502 = vld [vmem:[%s343 + $0x318] sm:$0xff]
        %v503 = vld [vmem:[%s343 + $0x320] sm:$0xff]
        %v504 = vld [vmem:[%s343 + $0x328] sm:$0xff]
        %v505 = vld [vmem:[%s343 + $0x330] sm:$0xff]
        %v506 = vld [vmem:[%s343 + $0x338] sm:$0xff]
        %v507 = vld [vmem:[%s343 + $0x340] sm:$0xff]
        %v508 = vld [vmem:[%s343 + $0x348] sm:$0xff]
        %v509 = vld [vmem:[%s343 + $0x350] sm:$0xff]
        %v510 = vld [vmem:[%s343 + $0x358] sm:$0xff]
        %v511 = vld [vmem:[%s343 + $0x360] sm:$0xff]
        %v512 = vld [vmem:[%s343 + $0x368] sm:$0xff]
        %v513 = vld [vmem:[%s343 + $0x370] sm:$0xff]
        %v514 = vld [vmem:[%s343 + $0x378] sm:$0xff]
        %v515 = vld [vmem:[%s343 + $0x380] sm:$0xff]
        %v516 = vld [vmem:[%s343 + $0x388] sm:$0xff]
        %v517 = vld [vmem:[%s343 + $0x390] sm:$0xff]
        %v518 = vld [vmem:[%s343 + $0x398] sm:$0xff]
        %v519 = vld [vmem:[%s343 + $0x3a0] sm:$0xff]
        %v520 = vld [vmem:[%s343 + $0x3a8] sm:$0xff]
        %v521 = vld [vmem:[%s343 + $0x3b0] sm:$0xff]
        %v522 = vld [vmem:[%s343 + $0x3b8] sm:$0xff]
        %v523 = vld [vmem:[%s343 + $0x3c0] sm:$0xff]
        %v524 = vld [vmem:[%s343 + $0x3c8] sm:$0xff]
        %v525 = vld [vmem:[%s343 + $0x3d0] sm:$0xff]
        %v526 = vld [vmem:[%s343 + $0x3d8] sm:$0xff]
        %v527 = vld [vmem:[%s343 + $0x3e0] sm:$0xff]
        %v528 = vld [vmem:[%s343 + $0x3e8] sm:$0xff]
        %v529 = vld [vmem:[%s343 + $0x3f0] sm:$0xff]
        %v530 = vld [vmem:[%s343 + $0x3f8] sm:$0xff]
        %v533 = vunpack.c.l.b16 %v401
        %v534 = vunpack.c.h.b16 %v401
        %v535 = vunpack.c.l.b16 %v402
        %v536 = vunpack.c.h.b16 %v402
        %v537 = vpack.c.b16 %v533, %v533
        %v538 = vpack.c.b16 %v534, %v534
        %v539 = vpack.c.b16 %v535, %v535
        %v540 = vpack.c.b16 %v536, %v536
        %v673 = vunpack.c.l.b16 %v403
        %v674 = vunpack.c.h.b16 %v403
        %v675 = vunpack.c.l.b16 %v404
        %v676 = vunpack.c.h.b16 %v404
        %v677 = vunpack.c.l.b16 %v405
        %v678 = vunpack.c.h.b16 %v405
        %v679 = vunpack.c.l.b16 %v406
        %v680 = vunpack.c.h.b16 %v406
        %v681 = vunpack.c.l.b16 %v407
        %v682 = vunpack.c.h.b16 %v407
        %v683 = vunpack.c.l.b16 %v408
        %v684 = vunpack.c.h.b16 %v408
        %v685 = vunpack.c.l.b16 %v409
        %v686 = vunpack.c.h.b16 %v409
        %v687 = vunpack.c.l.b16 %v410
        %v688 = vunpack.c.h.b16 %v410
        %v689 = vunpack.c.l.b16 %v411
        %v690 = vunpack.c.h.b16 %v411
        %v691 = vunpack.c.l.b16 %v412
        %v692 = vunpack.c.h.b16 %v412
        %v693 = vunpack.c.l.b16 %v413
        %v694 = vunpack.c.h.b16 %v413
        %v695 = vunpack.c.l.b16 %v414
        %v696 = vunpack.c.h.b16 %v414
        %v697 = vunpack.c.l.b16 %v415
        %v698 = vunpack.c.h.b16 %v415
        %v699 = vunpack.c.l.b16 %v416
        %v700 = vunpack.c.h.b16 %v416
        %v701 = vunpack.c.l.b16 %v417
        %v702 = vunpack.c.h.b16 %v417
        %v703 = vunpack.c.l.b16 %v418
        %v704 = vunpack.c.h.b16 %v418
        %v705 = vunpack.c.l.b16 %v419
        %v706 = vunpack.c.h.b16 %v419
        %v707 = vunpack.c.l.b16 %v420
        %v708 = vunpack.c.h.b16 %v420
        %v709 = vunpack.c.l.b16 %v421
        %v710 = vunpack.c.h.b16 %v421
        %v711 = vunpack.c.l.b16 %v422
        %v712 = vunpack.c.h.b16 %v422
        %v713 = vunpack.c.l.b16 %v423
        %v714 = vunpack.c.h.b16 %v423
        %v715 = vunpack.c.l.b16 %v424
        %v716 = vunpack.c.h.b16 %v424
        %v717 = vunpack.c.l.b16 %v425
        %v718 = vunpack.c.h.b16 %v425
        %v719 = vunpack.c.l.b16 %v426
        %v720 = vunpack.c.h.b16 %v426
        %v721 = vunpack.c.l.b16 %v427
        %v722 = vunpack.c.h.b16 %v427
        %v723 = vunpack.c.l.b16 %v428
        %v724 = vunpack.c.h.b16 %v428
        %v725 = vunpack.c.l.b16 %v429
        %v726 = vunpack.c.h.b16 %v429
        %v727 = vunpack.c.l.b16 %v430
        %v728 = vunpack.c.h.b16 %v430
        %v729 = vunpack.c.l.b16 %v431
        %v730 = vunpack.c.h.b16 %v431
        %v731 = vunpack.c.l.b16 %v432
        %v732 = vunpack.c.h.b16 %v432
        %v733 = vunpack.c.l.b16 %v433
        %v734 = vunpack.c.h.b16 %v433
        %v735 = vunpack.c.l.b16 %v434
        %v736 = vunpack.c.h.b16 %v434
        %v737 = vunpack.c.l.b16 %v435
        %v738 = vunpack.c.h.b16 %v435
        %v739 = vunpack.c.l.b16 %v436
        %v740 = vunpack.c.h.b16 %v436
        %v741 = vunpack.c.l.b16 %v437
        %v742 = vunpack.c.h.b16 %v437
        %v743 = vunpack.c.l.b16 %v438
        %v744 = vunpack.c.h.b16 %v438
        %v745 = vunpack.c.l.b16 %v439
        %v746 = vunpack.c.h.b16 %v439
        %v747 = vunpack.c.l.b16 %v440
        %v748 = vunpack.c.h.b16 %v440
        %v749 = vunpack.c.l.b16 %v441
        %v750 = vunpack.c.h.b16 %v441
        %v751 = vunpack.c.l.b16 %v442
        %v752 = vunpack.c.h.b16 %v442
        %v753 = vunpack.c.l.b16 %v443
        %v754 = vunpack.c.h.b16 %v443
        %v755 = vunpack.c.l.b16 %v444
        %v756 = vunpack.c.h.b16 %v444
        %v757 = vunpack.c.l.b16 %v445
        %v758 = vunpack.c.h.b16 %v445
        %v759 = vunpack.c.l.b16 %v446
        %v760 = vunpack.c.h.b16 %v446
        %v761 = vunpack.c.l.b16 %v447
        %v762 = vunpack.c.h.b16 %v447
        %v763 = vunpack.c.l.b16 %v448
        %v764 = vunpack.c.h.b16 %v448
        %v765 = vunpack.c.l.b16 %v449
        %v766 = vunpack.c.h.b16 %v449
        %v767 = vunpack.c.l.b16 %v450
        %v768 = vunpack.c.h.b16 %v450
        %v769 = vunpack.c.l.b16 %v451
        %v770 = vunpack.c.h.b16 %v451
        %v771 = vunpack.c.l.b16 %v452
        %v772 = vunpack.c.h.b16 %v452
        %v773 = vunpack.c.l.b16 %v453
        %v774 = vunpack.c.h.b16 %v453
        %v775 = vunpack.c.l.b16 %v454
        %v776 = vunpack.c.h.b16 %v454
        %v777 = vunpack.c.l.b16 %v455
        %v778 = vunpack.c.h.b16 %v455
        %v779 = vunpack.c.l.b16 %v456
        %v780 = vunpack.c.h.b16 %v456
        %v781 = vunpack.c.l.b16 %v457
        %v782 = vunpack.c.h.b16 %v457
        %v783 = vunpack.c.l.b16 %v458
        %v784 = vunpack.c.h.b16 %v458
        %v785 = vunpack.c.l.b16 %v459
        %v786 = vunpack.c.h.b16 %v459
        %v787 = vunpack.c.l.b16 %v460
        %v788 = vunpack.c.h.b16 %v460
        %v789 = vunpack.c.l.b16 %v461
        %v790 = vunpack.c.h.b16 %v461
        %v791 = vunpack.c.l.b16 %v462
        %v792 = vunpack.c.h.b16 %v462
        %v793 = vunpack.c.l.b16 %v463
        %v794 = vunpack.c.h.b16 %v463
        %v795 = vunpack.c.l.b16 %v464
        %v796 = vunpack.c.h.b16 %v464
        %v797 = vunpack.c.l.b16 %v465
        %v798 = vunpack.c.h.b16 %v465
        %v799 = vunpack.c.l.b16 %v466
        %v800 = vunpack.c.h.b16 %v466
        %v801 = vunpack.c.l.b16 %v467
        %v802 = vunpack.c.h.b16 %v467
        %v803 = vunpack.c.l.b16 %v468
        %v804 = vunpack.c.h.b16 %v468
        %v805 = vunpack.c.l.b16 %v469
        %v806 = vunpack.c.h.b16 %v469
        %v807 = vunpack.c.l.b16 %v470
        %v808 = vunpack.c.h.b16 %v470
        %v809 = vunpack.c.l.b16 %v471
        %v810 = vunpack.c.h.b16 %v471
        %v811 = vunpack.c.l.b16 %v472
        %v812 = vunpack.c.h.b16 %v472
        %v813 = vunpack.c.l.b16 %v473
        %v814 = vunpack.c.h.b16 %v473
        %v815 = vunpack.c.l.b16 %v474
        %v816 = vunpack.c.h.b16 %v474
        %v817 = vunpack.c.l.b16 %v475
        %v818 = vunpack.c.h.b16 %v475
        %v819 = vunpack.c.l.b16 %v476
        %v820 = vunpack.c.h.b16 %v476
        %v821 = vunpack.c.l.b16 %v477
        %v822 = vunpack.c.h.b16 %v477
        %v823 = vunpack.c.l.b16 %v478
        %v824 = vunpack.c.h.b16 %v478
        %v825 = vunpack.c.l.b16 %v479
        %v826 = vunpack.c.h.b16 %v479
        %v827 = vunpack.c.l.b16 %v480
        %v828 = vunpack.c.h.b16 %v480
        %v829 = vunpack.c.l.b16 %v481
        %v830 = vunpack.c.h.b16 %v481
        %v831 = vunpack.c.l.b16 %v482
        %v832 = vunpack.c.h.b16 %v482
        %v833 = vunpack.c.l.b16 %v483
        %v834 = vunpack.c.h.b16 %v483
        %v835 = vunpack.c.l.b16 %v484
        %v836 = vunpack.c.h.b16 %v484
        %v837 = vunpack.c.l.b16 %v485
        %v838 = vunpack.c.h.b16 %v485
        %v839 = vunpack.c.l.b16 %v486
        %v840 = vunpack.c.h.b16 %v486
        %v841 = vunpack.c.l.b16 %v487
        %v842 = vunpack.c.h.b16 %v487
        %v843 = vunpack.c.l.b16 %v488
        %v844 = vunpack.c.h.b16 %v488
        %v845 = vunpack.c.l.b16 %v489
        %v846 = vunpack.c.h.b16 %v489
        %v847 = vunpack.c.l.b16 %v490
        %v848 = vunpack.c.h.b16 %v490
        %v849 = vunpack.c.l.b16 %v491
        %v850 = vunpack.c.h.b16 %v491
        %v851 = vunpack.c.l.b16 %v492
        %v852 = vunpack.c.h.b16 %v492
        %v853 = vunpack.c.l.b16 %v493
        %v854 = vunpack.c.h.b16 %v493
        %v855 = vunpack.c.l.b16 %v494
        %v856 = vunpack.c.h.b16 %v494
        %v857 = vunpack.c.l.b16 %v495
        %v858 = vunpack.c.h.b16 %v495
        %v859 = vunpack.c.l.b16 %v496
        %v860 = vunpack.c.h.b16 %v496
        %v861 = vunpack.c.l.b16 %v497
        %v862 = vunpack.c.h.b16 %v497
        %v863 = vunpack.c.l.b16 %v498
        %v864 = vunpack.c.h.b16 %v498
        %v865 = vunpack.c.l.b16 %v499
        %v866 = vunpack.c.h.b16 %v499
        %v867 = vunpack.c.l.b16 %v500
        %v868 = vunpack.c.h.b16 %v500
        %v869 = vunpack.c.l.b16 %v501
        %v870 = vunpack.c.h.b16 %v501
        %v871 = vunpack.c.l.b16 %v502
        %v872 = vunpack.c.h.b16 %v502
        %v873 = vunpack.c.l.b16 %v503
        %v874 = vunpack.c.h.b16 %v503
        %v875 = vunpack.c.l.b16 %v504
        %v876 = vunpack.c.h.b16 %v504
        %v877 = vunpack.c.l.b16 %v505
        %v878 = vunpack.c.h.b16 %v505
        %v879 = vunpack.c.l.b16 %v506
        %v880 = vunpack.c.h.b16 %v506
        %v881 = vunpack.c.l.b16 %v507
        %v882 = vunpack.c.h.b16 %v507
        %v883 = vunpack.c.l.b16 %v508
        %v884 = vunpack.c.h.b16 %v508
        %v885 = vunpack.c.l.b16 %v509
        %v886 = vunpack.c.h.b16 %v509
        %v887 = vunpack.c.l.b16 %v510
        %v888 = vunpack.c.h.b16 %v510
        %v889 = vunpack.c.l.b16 %v511
        %v890 = vunpack.c.h.b16 %v511
        %v891 = vunpack.c.l.b16 %v512
        %v892 = vunpack.c.h.b16 %v512
        %v893 = vunpack.c.l.b16 %v513
        %v894 = vunpack.c.h.b16 %v513
        %v895 = vunpack.c.l.b16 %v514
        %v896 = vunpack.c.h.b16 %v514
        %v897 = vunpack.c.l.b16 %v515
        %v898 = vunpack.c.h.b16 %v515
        %v899 = vunpack.c.l.b16 %v516
        %v900 = vunpack.c.h.b16 %v516
        %v901 = vunpack.c.l.b16 %v517
        %v902 = vunpack.c.h.b16 %v517
        %v903 = vunpack.c.l.b16 %v518
        %v904 = vunpack.c.h.b16 %v518
        %v905 = vunpack.c.l.b16 %v519
        %v906 = vunpack.c.h.b16 %v519
        %v907 = vunpack.c.l.b16 %v520
        %v908 = vunpack.c.h.b16 %v520
        %v909 = vunpack.c.l.b16 %v521
        %v910 = vunpack.c.h.b16 %v521
        %v911 = vunpack.c.l.b16 %v522
        %v912 = vunpack.c.h.b16 %v522
        %v913 = vunpack.c.l.b16 %v523
        %v914 = vunpack.c.h.b16 %v523
        %v915 = vunpack.c.l.b16 %v524
        %v916 = vunpack.c.h.b16 %v524
        %v917 = vunpack.c.l.b16 %v525
        %v918 = vunpack.c.h.b16 %v525
        %v919 = vunpack.c.l.b16 %v526
        %v920 = vunpack.c.h.b16 %v526
        %v921 = vunpack.c.l.b16 %v527
        %v922 = vunpack.c.h.b16 %v527
        %v923 = vunpack.c.l.b16 %v528
        %v924 = vunpack.c.h.b16 %v528
        %v925 = vunpack.c.l.b16 %v529
        %v926 = vunpack.c.h.b16 %v529
        %v927 = vunpack.c.l.b16 %v530
        %v928 = vunpack.c.h.b16 %v530
        %v929 = vpack.c.b16 %v677, %v673
        %v930 = vpack.c.b16 %v678, %v674
        %v931 = vpack.c.b16 %v679, %v675
        %v932 = vpack.c.b16 %v680, %v676
        %v933 = vpack.c.b16 %v685, %v681
        %v934 = vpack.c.b16 %v686, %v682
        %v935 = vpack.c.b16 %v687, %v683
        %v936 = vpack.c.b16 %v688, %v684
        %v937 = vpack.c.b16 %v693, %v689
        %v938 = vpack.c.b16 %v694, %v690
        %v939 = vpack.c.b16 %v695, %v691
        %v940 = vpack.c.b16 %v696, %v692
        %v941 = vpack.c.b16 %v701, %v697
        %v942 = vpack.c.b16 %v702, %v698
        %v943 = vpack.c.b16 %v703, %v699
        %v944 = vpack.c.b16 %v704, %v700
        %v945 = vpack.c.b16 %v709, %v705
        %v946 = vpack.c.b16 %v710, %v706
        %v947 = vpack.c.b16 %v711, %v707
        %v948 = vpack.c.b16 %v712, %v708
        %v949 = vpack.c.b16 %v717, %v713
        %v950 = vpack.c.b16 %v718, %v714
        %v951 = vpack.c.b16 %v719, %v715
        %v952 = vpack.c.b16 %v720, %v716
        %v953 = vpack.c.b16 %v725, %v721
        %v954 = vpack.c.b16 %v726, %v722
        %v955 = vpack.c.b16 %v727, %v723
        %v956 = vpack.c.b16 %v728, %v724
        %v957 = vpack.c.b16 %v733, %v729
        %v958 = vpack.c.b16 %v734, %v730
        %v959 = vpack.c.b16 %v735, %v731
        %v960 = vpack.c.b16 %v736, %v732
        %v961 = vpack.c.b16 %v741, %v737
        %v962 = vpack.c.b16 %v742, %v738
        %v963 = vpack.c.b16 %v743, %v739
        %v964 = vpack.c.b16 %v744, %v740
        %v965 = vpack.c.b16 %v749, %v745
        %v966 = vpack.c.b16 %v750, %v746
        %v967 = vpack.c.b16 %v751, %v747
        %v968 = vpack.c.b16 %v752, %v748
        %v969 = vpack.c.b16 %v757, %v753
        %v970 = vpack.c.b16 %v758, %v754
        %v971 = vpack.c.b16 %v759, %v755
        %v972 = vpack.c.b16 %v760, %v756
        %v973 = vpack.c.b16 %v765, %v761
        %v974 = vpack.c.b16 %v766, %v762
        %v975 = vpack.c.b16 %v767, %v763
        %v976 = vpack.c.b16 %v768, %v764
        %v977 = vpack.c.b16 %v773, %v769
        %v978 = vpack.c.b16 %v774, %v770
        %v979 = vpack.c.b16 %v775, %v771
        %v980 = vpack.c.b16 %v776, %v772
        %v981 = vpack.c.b16 %v781, %v777
        %v982 = vpack.c.b16 %v782, %v778
        %v983 = vpack.c.b16 %v783, %v779
        %v984 = vpack.c.b16 %v784, %v780
        %v985 = vpack.c.b16 %v789, %v785
        %v986 = vpack.c.b16 %v790, %v786
        %v987 = vpack.c.b16 %v791, %v787
        %v988 = vpack.c.b16 %v792, %v788
        %v989 = vpack.c.b16 %v797, %v793
        %v990 = vpack.c.b16 %v798, %v794
        %v991 = vpack.c.b16 %v799, %v795
        %v992 = vpack.c.b16 %v800, %v796
        %v993 = vpack.c.b16 %v805, %v801
        %v994 = vpack.c.b16 %v806, %v802
        %v995 = vpack.c.b16 %v807, %v803
        %v996 = vpack.c.b16 %v808, %v804
        %v997 = vpack.c.b16 %v813, %v809
        %v998 = vpack.c.b16 %v814, %v810
        %v999 = vpack.c.b16 %v815, %v811
        %v1000 = vpack.c.b16 %v816, %v812
        %v1001 = vpack.c.b16 %v821, %v817
        %v1002 = vpack.c.b16 %v822, %v818
        %v1003 = vpack.c.b16 %v823, %v819
        %v1004 = vpack.c.b16 %v824, %v820
        %v1005 = vpack.c.b16 %v829, %v825
        %v1006 = vpack.c.b16 %v830, %v826
        %v1007 = vpack.c.b16 %v831, %v827
        %v1008 = vpack.c.b16 %v832, %v828
        %v1009 = vpack.c.b16 %v837, %v833
        %v1010 = vpack.c.b16 %v838, %v834
        %v1011 = vpack.c.b16 %v839, %v835
        %v1012 = vpack.c.b16 %v840, %v836
        %v1013 = vpack.c.b16 %v845, %v841
        %v1014 = vpack.c.b16 %v846, %v842
        %v1015 = vpack.c.b16 %v847, %v843
        %v1016 = vpack.c.b16 %v848, %v844
        %v1017 = vpack.c.b16 %v853, %v849
        %v1018 = vpack.c.b16 %v854, %v850
        %v1019 = vpack.c.b16 %v855, %v851
        %v1020 = vpack.c.b16 %v856, %v852
        %v1021 = vpack.c.b16 %v861, %v857
        %v1022 = vpack.c.b16 %v862, %v858
        %v1023 = vpack.c.b16 %v863, %v859
        %v1024 = vpack.c.b16 %v864, %v860
        %v1025 = vpack.c.b16 %v869, %v865
        %v1026 = vpack.c.b16 %v870, %v866
        %v1027 = vpack.c.b16 %v871, %v867
        %v1028 = vpack.c.b16 %v872, %v868
        %v1029 = vpack.c.b16 %v877, %v873
        %v1030 = vpack.c.b16 %v878, %v874
        %v1031 = vpack.c.b16 %v879, %v875
        %v1032 = vpack.c.b16 %v880, %v876
        %v1033 = vpack.c.b16 %v885, %v881
        %v1034 = vpack.c.b16 %v886, %v882
        %v1035 = vpack.c.b16 %v887, %v883
        %v1036 = vpack.c.b16 %v888, %v884
        %v1037 = vpack.c.b16 %v893, %v889
        %v1038 = vpack.c.b16 %v894, %v890
        %v1039 = vpack.c.b16 %v895, %v891
        %v1040 = vpack.c.b16 %v896, %v892
        %v1041 = vpack.c.b16 %v901, %v897
        %v1042 = vpack.c.b16 %v902, %v898
        %v1043 = vpack.c.b16 %v903, %v899
        %v1044 = vpack.c.b16 %v904, %v900
        %v1045 = vpack.c.b16 %v909, %v905
        %v1046 = vpack.c.b16 %v910, %v906
        %v1047 = vpack.c.b16 %v911, %v907
        %v1048 = vpack.c.b16 %v912, %v908
        %v1049 = vpack.c.b16 %v917, %v913
        %v1050 = vpack.c.b16 %v918, %v914
        %v1051 = vpack.c.b16 %v919, %v915
        %v1052 = vpack.c.b16 %v920, %v916
        %v1053 = vpack.c.b16 %v925, %v921
        %v1054 = vpack.c.b16 %v926, %v922
        %v1055 = vpack.c.b16 %v927, %v923
        %v1056 = vpack.c.b16 %v928, %v924
        %1185 = vmatprep.subr.bf16.mxu0 %v958
        %1186 = vmatpush1.bf16.msra.mxu0 %v957
        %1187 = vmatprep.subr.bf16.mxu0 %v954
        %1188 = vmatpush1.bf16.msra.mxu0 %v953
        %1189 = vmatprep.subr.bf16.mxu0 %v950
        %1190 = vmatpush1.bf16.msra.mxu0 %v949
        %1191 = vmatprep.subr.bf16.mxu0 %v946
        %1192 = vmatpush1.bf16.msra.mxu0 %v945
        %1193 = vmatprep.subr.bf16.mxu0 %v942
        %1194 = vmatpush1.bf16.msra.mxu0 %v941
        %1195 = vmatprep.subr.bf16.mxu0 %v938
        %1196 = vmatpush1.bf16.msra.mxu0 %v937
        %1197 = vmatprep.subr.bf16.mxu0 %v934
        %1198 = vmatpush1.bf16.msra.mxu0 %v933
        %1199 = vmatprep.subr.bf16.mxu0 %v930
        %1200 = vmatpush1.bf16.msra.mxu0 %v929
        %1201 = vmatprep.subr.bf16.mxu0 %v990
        %1202 = vmatpush2.bf16.msra.mxu0 %v989
        %1203 = vmatprep.subr.bf16.mxu0 %v986
        %1204 = vmatpush2.bf16.msra.mxu0 %v985
        %1205 = vmatprep.subr.bf16.mxu0 %v982
        %1206 = vmatpush2.bf16.msra.mxu0 %v981
        %1207 = vmatprep.subr.bf16.mxu0 %v978
        %1208 = vmatpush2.bf16.msra.mxu0 %v977
        %1209 = vmatprep.subr.bf16.mxu0 %v974
        %1210 = vmatpush2.bf16.msra.mxu0 %v973
        %1211 = vmatprep.subr.bf16.mxu0 %v970
        %1212 = vmatpush2.bf16.msra.mxu0 %v969
        %1213 = vmatprep.subr.bf16.mxu0 %v966
        %1214 = vmatpush2.bf16.msra.mxu0 %v965
        %1215 = vmatprep.subr.bf16.mxu0 %v962
        %1216 = vmatpush2.bf16.msra.mxu0 %v961
        %1217 = vmatprep.mubr.bf16.mxu0 %v538
        %1218 = vmatmul.mubr.bf16.gmra.mxu0 %v537
        %v1219 = vpop.f32.mrf.mxu0
        %v1220 = vadd.f32 0.0, %v1219
        %v1221 = vpop.f32.mrf.mxu0
        %v1222 = vadd.f32 0.0, %v1221
        %v1223 = vpop.f32.mrf.mxu0
        %v1224 = vpop.f32.mrf.mxu0
        %1225 = vdwg.mxu0
        %1226 = vmatprep.subr.bf16.mxu0 %v1022
        %1227 = vmatpush1.bf16.msra.mxu0 %v1021
        %1228 = vmatprep.subr.bf16.mxu0 %v1018
        %1229 = vmatpush1.bf16.msra.mxu0 %v1017
        %1230 = vmatprep.subr.bf16.mxu0 %v1014
        %1231 = vmatpush1.bf16.msra.mxu0 %v1013
        %1232 = vmatprep.subr.bf16.mxu0 %v1010
        %1233 = vmatpush1.bf16.msra.mxu0 %v1009
        %1234 = vmatprep.subr.bf16.mxu0 %v1006
        %1235 = vmatpush1.bf16.msra.mxu0 %v1005
        %1236 = vmatprep.subr.bf16.mxu0 %v1002
        %1237 = vmatpush1.bf16.msra.mxu0 %v1001
        %1238 = vmatprep.subr.bf16.mxu0 %v998
        %1239 = vmatpush1.bf16.msra.mxu0 %v997
        %1240 = vmatprep.subr.bf16.mxu0 %v994
        %1241 = vmatpush1.bf16.msra.mxu0 %v993
        %1242 = vmatprep.subr.bf16.mxu0 %v1054
        %1243 = vmatpush2.bf16.msra.mxu0 %v1053
        %1244 = vmatprep.subr.bf16.mxu0 %v1050
        %1245 = vmatpush2.bf16.msra.mxu0 %v1049
        %1246 = vmatprep.subr.bf16.mxu0 %v1046
        %1247 = vmatpush2.bf16.msra.mxu0 %v1045
        %1248 = vmatprep.subr.bf16.mxu0 %v1042
        %1249 = vmatpush2.bf16.msra.mxu0 %v1041
        %1250 = vmatprep.subr.bf16.mxu0 %v1038
        %1251 = vmatpush2.bf16.msra.mxu0 %v1037
        %1252 = vmatprep.subr.bf16.mxu0 %v1034
        %1253 = vmatpush2.bf16.msra.mxu0 %v1033
        %1254 = vmatprep.subr.bf16.mxu0 %v1030
        %1255 = vmatpush2.bf16.msra.mxu0 %v1029
        %1256 = vmatprep.subr.bf16.mxu0 %v1026
        %1257 = vmatpush2.bf16.msra.mxu0 %v1025
        %1258 = vmatprep.mubr.bf16.mxu0 %v540
        %1259 = vmatmul.mubr.bf16.gmra.mxu0 %v539
        %v1260 = vpop.f32.mrf.mxu0
        %v1261 = vadd.f32 %v1220, %v1260
        %v1262 = vpop.f32.mrf.mxu0
        %v1263 = vadd.f32 %v1222, %v1262
        %v1264 = vpop.f32.mrf.mxu0
        %v1265 = vpop.f32.mrf.mxu0
        %1266 = vdwg.mxu0
        %1267 = vmatprep.subr.bf16.mxu0 %v960
        %1268 = vmatpush1.bf16.msra.mxu0 %v959
        %1269 = vmatprep.subr.bf16.mxu0 %v956
        %1270 = vmatpush1.bf16.msra.mxu0 %v955
        %1271 = vmatprep.subr.bf16.mxu0 %v952
        %1272 = vmatpush1.bf16.msra.mxu0 %v951
        %1273 = vmatprep.subr.bf16.mxu0 %v948
        %1274 = vmatpush1.bf16.msra.mxu0 %v947
        %1275 = vmatprep.subr.bf16.mxu0 %v944
        %1276 = vmatpush1.bf16.msra.mxu0 %v943
        %1277 = vmatprep.subr.bf16.mxu0 %v940
        %1278 = vmatpush1.bf16.msra.mxu0 %v939
        %1279 = vmatprep.subr.bf16.mxu0 %v936
        %1280 = vmatpush1.bf16.msra.mxu0 %v935
        %1281 = vmatprep.subr.bf16.mxu0 %v932
        %1282 = vmatpush1.bf16.msra.mxu0 %v931
        %1283 = vmatprep.subr.bf16.mxu0 %v992
        %1284 = vmatpush2.bf16.msra.mxu0 %v991
        %1285 = vmatprep.subr.bf16.mxu0 %v988
        %1286 = vmatpush2.bf16.msra.mxu0 %v987
        %1287 = vmatprep.subr.bf16.mxu0 %v984
        %1288 = vmatpush2.bf16.msra.mxu0 %v983
        %1289 = vmatprep.subr.bf16.mxu0 %v980
        %1290 = vmatpush2.bf16.msra.mxu0 %v979
        %1291 = vmatprep.subr.bf16.mxu0 %v976
        %1292 = vmatpush2.bf16.msra.mxu0 %v975
        %1293 = vmatprep.subr.bf16.mxu0 %v972
        %1294 = vmatpush2.bf16.msra.mxu0 %v971
        %1295 = vmatprep.subr.bf16.mxu0 %v968
        %1296 = vmatpush2.bf16.msra.mxu0 %v967
        %1297 = vmatprep.subr.bf16.mxu0 %v964
        %1298 = vmatpush2.bf16.msra.mxu0 %v963
        %1299 = vmatprep.mubr.bf16.mxu0 %v538
        %1300 = vmatmul.mubr.bf16.gmra.mxu0 %v537
        %v1301 = vpop.f32.mrf.mxu0
        %v1302 = vadd.f32 0.0, %v1301
        %v1303 = vpop.f32.mrf.mxu0
        %v1304 = vadd.f32 0.0, %v1303
        %v1305 = vpop.f32.mrf.mxu0
        %v1306 = vpop.f32.mrf.mxu0
        %1307 = vdwg.mxu0
        %1308 = vmatprep.subr.bf16.mxu0 %v1024
        %1309 = vmatpush1.bf16.msra.mxu0 %v1023
        %1310 = vmatprep.subr.bf16.mxu0 %v1020
        %1311 = vmatpush1.bf16.msra.mxu0 %v1019
        %1312 = vmatprep.subr.bf16.mxu0 %v1016
        %1313 = vmatpush1.bf16.msra.mxu0 %v1015
        %1314 = vmatprep.subr.bf16.mxu0 %v1012
        %1315 = vmatpush1.bf16.msra.mxu0 %v1011
        %1316 = vmatprep.subr.bf16.mxu0 %v1008
        %1317 = vmatpush1.bf16.msra.mxu0 %v1007
        %1318 = vmatprep.subr.bf16.mxu0 %v1004
        %1319 = vmatpush1.bf16.msra.mxu0 %v1003
        %1320 = vmatprep.subr.bf16.mxu0 %v1000
        %1321 = vmatpush1.bf16.msra.mxu0 %v999
        %1322 = vmatprep.subr.bf16.mxu0 %v996
        %1323 = vmatpush1.bf16.msra.mxu0 %v995
        %1324 = vmatprep.subr.bf16.mxu0 %v1056
        %1325 = vmatpush2.bf16.msra.mxu0 %v1055
        %1326 = vmatprep.subr.bf16.mxu0 %v1052
        %1327 = vmatpush2.bf16.msra.mxu0 %v1051
        %1328 = vmatprep.subr.bf16.mxu0 %v1048
        %1329 = vmatpush2.bf16.msra.mxu0 %v1047
        %1330 = vmatprep.subr.bf16.mxu0 %v1044
        %1331 = vmatpush2.bf16.msra.mxu0 %v1043
        %1332 = vmatprep.subr.bf16.mxu0 %v1040
        %1333 = vmatpush2.bf16.msra.mxu0 %v1039
        %1334 = vmatprep.subr.bf16.mxu0 %v1036
        %1335 = vmatpush2.bf16.msra.mxu0 %v1035
        %1336 = vmatprep.subr.bf16.mxu0 %v1032
        %1337 = vmatpush2.bf16.msra.mxu0 %v1031
        %1338 = vmatprep.subr.bf16.mxu0 %v1028
        %1339 = vmatpush2.bf16.msra.mxu0 %v1027
        %1340 = vmatprep.mubr.bf16.mxu0 %v540
        %1341 = vmatmul.mubr.bf16.gmra.mxu0 %v539
        %v1342 = vpop.f32.mrf.mxu0
        %v1343 = vadd.f32 %v1302, %v1342
        %v1344 = vpop.f32.mrf.mxu0
        %v1345 = vadd.f32 %v1304, %v1344
        %v1346 = vpop.f32.mrf.mxu0
        %v1347 = vpop.f32.mrf.mxu0
        %1348 = vdwg.mxu0
        %v1349 = vadd.f32 %v397, %v1261
        %v1350 = vadd.f32 %v398, %v1263
        %v1351 = vadd.f32 %v399, %v1343
        %v1352 = vadd.f32 %v400, %v1345
        %1353 = vst [vmem:[#allocation2] sm:$0xff] %v1349
        %1354 = vst [vmem:[#allocation2 + $0x8] sm:$0xff] %v1350
        %1355 = vst [vmem:[#allocation2 + $0x10] sm:$0xff] %v1351
        %1356 = vst [vmem:[#allocation2 + $0x18] sm:$0xff] %v1352
        %p1357 = scmp.eq.s32.totalorder %s31, 1
        // Predicated region
        $region73: #{tpu_custom_call.1} parent=47 // pred_check
          %p1358 = pneg %p1357
        $region74: #{tpu_custom_call.1} parent=47 // pred_check_branch
          %1360 = sbr.rel (%p1358) target = $region76
        $region75: #{tpu_custom_call.1} parent=47 // pred_region
          %v1361 = vld [vmem:[#allocation2] sm:$0xff]
          %v1362 = vld [vmem:[#allocation2 + $0x8] sm:$0xff]
          %v1363 = vld [vmem:[#allocation2 + $0x10] sm:$0xff]
          %v1364 = vld [vmem:[#allocation2 + $0x18] sm:$0xff]
          %v1365 = vld [vmem:[#allocation8] sm:$0xf]
          %v1367 = vlaneseq
          %v1368 = vshrl.u32 %v1367, 7
          %v1369 = vsub.s32 0, %v1368
          %v1370 = vrot.slane %v1365, %v1369
          %v1371 = vlaneseq
          %v1372 = vshrl.u32 %v1371, 7
          %v1373 = vsub.s32 1, %v1372
          %v1374 = vrot.slane %v1365, %v1373
          %v1375 = vlaneseq
          %v1376 = vshrl.u32 %v1375, 7
          %v1377 = vsub.s32 2, %v1376
          %v1378 = vrot.slane %v1365, %v1377
          %v1379 = vlaneseq
          %v1380 = vshrl.u32 %v1379, 7
          %v1381 = vsub.s32 3, %v1380
          %v1382 = vrot.slane %v1365, %v1381
          %v1387 = vadd.f32 %v1361, %v1370
          %v1388 = vadd.f32 %v1362, %v1374
          %v1389 = vadd.f32 %v1363, %v1378
          %v1390 = vadd.f32 %v1364, %v1382
          %vm1391 = vcmp.gt.f32.partialorder %v1387, 0.0
          %vm1392 = vcmp.gt.f32.partialorder %v1388, 0.0
          %vm1393 = vcmp.gt.f32.partialorder %v1389, 0.0
          %vm1394 = vcmp.gt.f32.partialorder %v1390, 0.0
          %v1395 = vmul.f32 %v1387, 0.2
          %v1396 = vmul.f32 %v1388, 0.2
          %v1397 = vmul.f32 %v1389, 0.2
          %v1398 = vmul.f32 %v1390, 0.2
          %v1399 = vsel %vm1391, %v1387, %v1395
          %v1400 = vsel %vm1392, %v1388, %v1396
          %v1401 = vsel %vm1393, %v1389, %v1397
          %v1402 = vsel %vm1394, %v1390, %v1398
          %v1403 = vpack.c.bf16 %v1399, %v1399
          %v1404 = vpack.c.bf16 %v1400, %v1400
          %v1405 = vpack.c.bf16 %v1401, %v1401
          %v1406 = vpack.c.bf16 %v1402, %v1402
          %v1407 = vld [vmem:[#allocation9] sm:$0xff]
          %v1408 = vld [vmem:[#allocation9 + $0x8] sm:$0xff]
          %v1409 = vld [vmem:[#allocation9 + $0x10] sm:$0xff]
          %v1410 = vld [vmem:[#allocation9 + $0x18] sm:$0xff]
          %v1411 = vld [vmem:[#allocation9 + $0x20] sm:$0xff]
          %v1412 = vld [vmem:[#allocation9 + $0x28] sm:$0xff]
          %v1413 = vld [vmem:[#allocation9 + $0x30] sm:$0xff]
          %v1414 = vld [vmem:[#allocation9 + $0x38] sm:$0xff]
          %v1415 = vld [vmem:[#allocation9 + $0x40] sm:$0xff]
          %v1416 = vld [vmem:[#allocation9 + $0x48] sm:$0xff]
          %v1417 = vld [vmem:[#allocation9 + $0x50] sm:$0xff]
          %v1418 = vld [vmem:[#allocation9 + $0x58] sm:$0xff]
          %v1419 = vld [vmem:[#allocation9 + $0x60] sm:$0xff]
          %v1420 = vld [vmem:[#allocation9 + $0x68] sm:$0xff]
          %v1421 = vld [vmem:[#allocation9 + $0x70] sm:$0xff]
          %v1422 = vld [vmem:[#allocation9 + $0x78] sm:$0xff]
          %v1423 = vld [vmem:[#allocation9 + $0x80] sm:$0xff]
          %v1424 = vld [vmem:[#allocation9 + $0x88] sm:$0xff]
          %v1425 = vld [vmem:[#allocation9 + $0x90] sm:$0xff]
          %v1426 = vld [vmem:[#allocation9 + $0x98] sm:$0xff]
          %v1427 = vld [vmem:[#allocation9 + $0xa0] sm:$0xff]
          %v1428 = vld [vmem:[#allocation9 + $0xa8] sm:$0xff]
          %v1429 = vld [vmem:[#allocation9 + $0xb0] sm:$0xff]
          %v1430 = vld [vmem:[#allocation9 + $0xb8] sm:$0xff]
          %v1431 = vld [vmem:[#allocation9 + $0xc0] sm:$0xff]
          %v1432 = vld [vmem:[#allocation9 + $0xc8] sm:$0xff]
          %v1433 = vld [vmem:[#allocation9 + $0xd0] sm:$0xff]
          %v1434 = vld [vmem:[#allocation9 + $0xd8] sm:$0xff]
          %v1435 = vld [vmem:[#allocation9 + $0xe0] sm:$0xff]
          %v1436 = vld [vmem:[#allocation9 + $0xe8] sm:$0xff]
          %v1437 = vld [vmem:[#allocation9 + $0xf0] sm:$0xff]
          %v1438 = vld [vmem:[#allocation9 + $0xf8] sm:$0xff]
          %v1439 = vld [vmem:[#allocation9 + $0x100] sm:$0xff]
          %v1440 = vld [vmem:[#allocation9 + $0x108] sm:$0xff]
          %v1441 = vld [vmem:[#allocation9 + $0x110] sm:$0xff]
          %v1442 = vld [vmem:[#allocation9 + $0x118] sm:$0xff]
          %v1443 = vld [vmem:[#allocation9 + $0x120] sm:$0xff]
          %v1444 = vld [vmem:[#allocation9 + $0x128] sm:$0xff]
          %v1445 = vld [vmem:[#allocation9 + $0x130] sm:$0xff]
          %v1446 = vld [vmem:[#allocation9 + $0x138] sm:$0xff]
          %v1447 = vld [vmem:[#allocation9 + $0x140] sm:$0xff]
          %v1448 = vld [vmem:[#allocation9 + $0x148] sm:$0xff]
          %v1449 = vld [vmem:[#allocation9 + $0x150] sm:$0xff]
          %v1450 = vld [vmem:[#allocation9 + $0x158] sm:$0xff]
          %v1451 = vld [vmem:[#allocation9 + $0x160] sm:$0xff]
          %v1452 = vld [vmem:[#allocation9 + $0x168] sm:$0xff]
          %v1453 = vld [vmem:[#allocation9 + $0x170] sm:$0xff]
          %v1454 = vld [vmem:[#allocation9 + $0x178] sm:$0xff]
          %v1455 = vld [vmem:[#allocation9 + $0x180] sm:$0xff]
          %v1456 = vld [vmem:[#allocation9 + $0x188] sm:$0xff]
          %v1457 = vld [vmem:[#allocation9 + $0x190] sm:$0xff]
          %v1458 = vld [vmem:[#allocation9 + $0x198] sm:$0xff]
          %v1459 = vld [vmem:[#allocation9 + $0x1a0] sm:$0xff]
          %v1460 = vld [vmem:[#allocation9 + $0x1a8] sm:$0xff]
          %v1461 = vld [vmem:[#allocation9 + $0x1b0] sm:$0xff]
          %v1462 = vld [vmem:[#allocation9 + $0x1b8] sm:$0xff]
          %v1463 = vld [vmem:[#allocation9 + $0x1c0] sm:$0xff]
          %v1464 = vld [vmem:[#allocation9 + $0x1c8] sm:$0xff]
          %v1465 = vld [vmem:[#allocation9 + $0x1d0] sm:$0xff]
          %v1466 = vld [vmem:[#allocation9 + $0x1d8] sm:$0xff]
          %v1467 = vld [vmem:[#allocation9 + $0x1e0] sm:$0xff]
          %v1468 = vld [vmem:[#allocation9 + $0x1e8] sm:$0xff]
          %v1469 = vld [vmem:[#allocation9 + $0x1f0] sm:$0xff]
          %v1470 = vld [vmem:[#allocation9 + $0x1f8] sm:$0xff]
          %v1471 = vld [vmem:[%s4] sm:$0x3]
          %v1473 = vlaneseq
          %v1474 = vshrl.u32 %v1473, 7
          %v1475 = vsub.s32 0, %v1474
          %v1476 = vrot.slane %v1471, %v1475
          %v1477 = vlaneseq
          %v1478 = vshrl.u32 %v1477, 7
          %v1479 = vsub.s32 1, %v1478
          %v1480 = vrot.slane %v1471, %v1479
          %v1547 = vunpack.c.l.b16 %v1407
          %v1548 = vunpack.c.h.b16 %v1407
          %v1549 = vunpack.c.l.b16 %v1408
          %v1550 = vunpack.c.h.b16 %v1408
          %v1551 = vunpack.c.l.b16 %v1409
          %v1552 = vunpack.c.h.b16 %v1409
          %v1553 = vunpack.c.l.b16 %v1410
          %v1554 = vunpack.c.h.b16 %v1410
          %v1555 = vunpack.c.l.b16 %v1411
          %v1556 = vunpack.c.h.b16 %v1411
          %v1557 = vunpack.c.l.b16 %v1412
          %v1558 = vunpack.c.h.b16 %v1412
          %v1559 = vunpack.c.l.b16 %v1413
          %v1560 = vunpack.c.h.b16 %v1413
          %v1561 = vunpack.c.l.b16 %v1414
          %v1562 = vunpack.c.h.b16 %v1414
          %v1563 = vunpack.c.l.b16 %v1415
          %v1564 = vunpack.c.h.b16 %v1415
          %v1565 = vunpack.c.l.b16 %v1416
          %v1566 = vunpack.c.h.b16 %v1416
          %v1567 = vunpack.c.l.b16 %v1417
          %v1568 = vunpack.c.h.b16 %v1417
          %v1569 = vunpack.c.l.b16 %v1418
          %v1570 = vunpack.c.h.b16 %v1418
          %v1571 = vunpack.c.l.b16 %v1419
          %v1572 = vunpack.c.h.b16 %v1419
          %v1573 = vunpack.c.l.b16 %v1420
          %v1574 = vunpack.c.h.b16 %v1420
          %v1575 = vunpack.c.l.b16 %v1421
          %v1576 = vunpack.c.h.b16 %v1421
          %v1577 = vunpack.c.l.b16 %v1422
          %v1578 = vunpack.c.h.b16 %v1422
          %v1579 = vunpack.c.l.b16 %v1423
          %v1580 = vunpack.c.h.b16 %v1423
          %v1581 = vunpack.c.l.b16 %v1424
          %v1582 = vunpack.c.h.b16 %v1424
          %v1583 = vunpack.c.l.b16 %v1425
          %v1584 = vunpack.c.h.b16 %v1425
          %v1585 = vunpack.c.l.b16 %v1426
          %v1586 = vunpack.c.h.b16 %v1426
          %v1587 = vunpack.c.l.b16 %v1427
          %v1588 = vunpack.c.h.b16 %v1427
          %v1589 = vunpack.c.l.b16 %v1428
          %v1590 = vunpack.c.h.b16 %v1428
          %v1591 = vunpack.c.l.b16 %v1429
          %v1592 = vunpack.c.h.b16 %v1429
          %v1593 = vunpack.c.l.b16 %v1430
          %v1594 = vunpack.c.h.b16 %v1430
          %v1595 = vunpack.c.l.b16 %v1431
          %v1596 = vunpack.c.h.b16 %v1431
          %v1597 = vunpack.c.l.b16 %v1432
          %v1598 = vunpack.c.h.b16 %v1432
          %v1599 = vunpack.c.l.b16 %v1433
          %v1600 = vunpack.c.h.b16 %v1433
          %v1601 = vunpack.c.l.b16 %v1434
          %v1602 = vunpack.c.h.b16 %v1434
          %v1603 = vunpack.c.l.b16 %v1435
          %v1604 = vunpack.c.h.b16 %v1435
          %v1605 = vunpack.c.l.b16 %v1436
          %v1606 = vunpack.c.h.b16 %v1436
          %v1607 = vunpack.c.l.b16 %v1437
          %v1608 = vunpack.c.h.b16 %v1437
          %v1609 = vunpack.c.l.b16 %v1438
          %v1610 = vunpack.c.h.b16 %v1438
          %v1611 = vunpack.c.l.b16 %v1439
          %v1612 = vunpack.c.h.b16 %v1439
          %v1613 = vunpack.c.l.b16 %v1440
          %v1614 = vunpack.c.h.b16 %v1440
          %v1615 = vunpack.c.l.b16 %v1441
          %v1616 = vunpack.c.h.b16 %v1441
          %v1617 = vunpack.c.l.b16 %v1442
          %v1618 = vunpack.c.h.b16 %v1442
          %v1619 = vunpack.c.l.b16 %v1443
          %v1620 = vunpack.c.h.b16 %v1443
          %v1621 = vunpack.c.l.b16 %v1444
          %v1622 = vunpack.c.h.b16 %v1444
          %v1623 = vunpack.c.l.b16 %v1445
          %v1624 = vunpack.c.h.b16 %v1445
          %v1625 = vunpack.c.l.b16 %v1446
          %v1626 = vunpack.c.h.b16 %v1446
          %v1627 = vunpack.c.l.b16 %v1447
          %v1628 = vunpack.c.h.b16 %v1447
          %v1629 = vunpack.c.l.b16 %v1448
          %v1630 = vunpack.c.h.b16 %v1448
          %v1631 = vunpack.c.l.b16 %v1449
          %v1632 = vunpack.c.h.b16 %v1449
          %v1633 = vunpack.c.l.b16 %v1450
          %v1634 = vunpack.c.h.b16 %v1450
          %v1635 = vunpack.c.l.b16 %v1451
          %v1636 = vunpack.c.h.b16 %v1451
          %v1637 = vunpack.c.l.b16 %v1452
          %v1638 = vunpack.c.h.b16 %v1452
          %v1639 = vunpack.c.l.b16 %v1453
          %v1640 = vunpack.c.h.b16 %v1453
          %v1641 = vunpack.c.l.b16 %v1454
          %v1642 = vunpack.c.h.b16 %v1454
          %v1643 = vunpack.c.l.b16 %v1455
          %v1644 = vunpack.c.h.b16 %v1455
          %v1645 = vunpack.c.l.b16 %v1456
          %v1646 = vunpack.c.h.b16 %v1456
          %v1647 = vunpack.c.l.b16 %v1457
          %v1648 = vunpack.c.h.b16 %v1457
          %v1649 = vunpack.c.l.b16 %v1458
          %v1650 = vunpack.c.h.b16 %v1458
          %v1651 = vunpack.c.l.b16 %v1459
          %v1652 = vunpack.c.h.b16 %v1459
          %v1653 = vunpack.c.l.b16 %v1460
          %v1654 = vunpack.c.h.b16 %v1460
          %v1655 = vunpack.c.l.b16 %v1461
          %v1656 = vunpack.c.h.b16 %v1461
          %v1657 = vunpack.c.l.b16 %v1462
          %v1658 = vunpack.c.h.b16 %v1462
          %v1659 = vunpack.c.l.b16 %v1463
          %v1660 = vunpack.c.h.b16 %v1463
          %v1661 = vunpack.c.l.b16 %v1464
          %v1662 = vunpack.c.h.b16 %v1464
          %v1663 = vunpack.c.l.b16 %v1465
          %v1664 = vunpack.c.h.b16 %v1465
          %v1665 = vunpack.c.l.b16 %v1466
          %v1666 = vunpack.c.h.b16 %v1466
          %v1667 = vunpack.c.l.b16 %v1467
          %v1668 = vunpack.c.h.b16 %v1467
          %v1669 = vunpack.c.l.b16 %v1468
          %v1670 = vunpack.c.h.b16 %v1468
          %v1671 = vunpack.c.l.b16 %v1469
          %v1672 = vunpack.c.h.b16 %v1469
          %v1673 = vunpack.c.l.b16 %v1470
          %v1674 = vunpack.c.h.b16 %v1470
          %v1675 = vpack.c.b16 %v1549, %v1547
          %v1676 = vpack.c.b16 %v1550, %v1548
          %v1677 = vpack.c.b16 %v1553, %v1551
          %v1678 = vpack.c.b16 %v1554, %v1552
          %v1679 = vpack.c.b16 %v1557, %v1555
          %v1680 = vpack.c.b16 %v1558, %v1556
          %v1681 = vpack.c.b16 %v1561, %v1559
          %v1682 = vpack.c.b16 %v1562, %v1560
          %v1683 = vpack.c.b16 %v1565, %v1563
          %v1684 = vpack.c.b16 %v1566, %v1564
          %v1685 = vpack.c.b16 %v1569, %v1567
          %v1686 = vpack.c.b16 %v1570, %v1568
          %v1687 = vpack.c.b16 %v1573, %v1571
          %v1688 = vpack.c.b16 %v1574, %v1572
          %v1689 = vpack.c.b16 %v1577, %v1575
          %v1690 = vpack.c.b16 %v1578, %v1576
          %v1691 = vpack.c.b16 %v1581, %v1579
          %v1692 = vpack.c.b16 %v1582, %v1580
          %v1693 = vpack.c.b16 %v1585, %v1583
          %v1694 = vpack.c.b16 %v1586, %v1584
          %v1695 = vpack.c.b16 %v1589, %v1587
          %v1696 = vpack.c.b16 %v1590, %v1588
          %v1697 = vpack.c.b16 %v1593, %v1591
          %v1698 = vpack.c.b16 %v1594, %v1592
          %v1699 = vpack.c.b16 %v1597, %v1595
          %v1700 = vpack.c.b16 %v1598, %v1596
          %v1701 = vpack.c.b16 %v1601, %v1599
          %v1702 = vpack.c.b16 %v1602, %v1600
          %v1703 = vpack.c.b16 %v1605, %v1603
          %v1704 = vpack.c.b16 %v1606, %v1604
          %v1705 = vpack.c.b16 %v1609, %v1607
          %v1706 = vpack.c.b16 %v1610, %v1608
          %v1707 = vpack.c.b16 %v1613, %v1611
          %v1708 = vpack.c.b16 %v1614, %v1612
          %v1709 = vpack.c.b16 %v1617, %v1615
          %v1710 = vpack.c.b16 %v1618, %v1616
          %v1711 = vpack.c.b16 %v1621, %v1619
          %v1712 = vpack.c.b16 %v1622, %v1620
          %v1713 = vpack.c.b16 %v1625, %v1623
          %v1714 = vpack.c.b16 %v1626, %v1624
          %v1715 = vpack.c.b16 %v1629, %v1627
          %v1716 = vpack.c.b16 %v1630, %v1628
          %v1717 = vpack.c.b16 %v1633, %v1631
          %v1718 = vpack.c.b16 %v1634, %v1632
          %v1719 = vpack.c.b16 %v1637, %v1635
          %v1720 = vpack.c.b16 %v1638, %v1636
          %v1721 = vpack.c.b16 %v1641, %v1639
          %v1722 = vpack.c.b16 %v1642, %v1640
          %v1723 = vpack.c.b16 %v1645, %v1643
          %v1724 = vpack.c.b16 %v1646, %v1644
          %v1725 = vpack.c.b16 %v1649, %v1647
          %v1726 = vpack.c.b16 %v1650, %v1648
          %v1727 = vpack.c.b16 %v1653, %v1651
          %v1728 = vpack.c.b16 %v1654, %v1652
          %v1729 = vpack.c.b16 %v1657, %v1655
          %v1730 = vpack.c.b16 %v1658, %v1656
          %v1731 = vpack.c.b16 %v1661, %v1659
          %v1732 = vpack.c.b16 %v1662, %v1660
          %v1733 = vpack.c.b16 %v1665, %v1663
          %v1734 = vpack.c.b16 %v1666, %v1664
          %v1735 = vpack.c.b16 %v1669, %v1667
          %v1736 = vpack.c.b16 %v1670, %v1668
          %v1737 = vpack.c.b16 %v1673, %v1671
          %v1738 = vpack.c.b16 %v1674, %v1672
          %1803 = vmatprep.subr.bf16.mxu0 %v1690
          %1804 = vmatpush1.bf16.msra.mxu0 %v1689
          %1805 = vmatprep.subr.bf16.mxu0 %v1688
          %1806 = vmatpush1.bf16.msra.mxu0 %v1687
          %1807 = vmatprep.subr.bf16.mxu0 %v1686
          %1808 = vmatpush1.bf16.msra.mxu0 %v1685
          %1809 = vmatprep.subr.bf16.mxu0 %v1684
          %1810 = vmatpush1.bf16.msra.mxu0 %v1683
          %1811 = vmatprep.subr.bf16.mxu0 %v1682
          %1812 = vmatpush1.bf16.msra.mxu0 %v1681
          %1813 = vmatprep.subr.bf16.mxu0 %v1680
          %1814 = vmatpush1.bf16.msra.mxu0 %v1679
          %1815 = vmatprep.subr.bf16.mxu0 %v1678
          %1816 = vmatpush1.bf16.msra.mxu0 %v1677
          %1817 = vmatprep.subr.bf16.mxu0 %v1676
          %1818 = vmatpush1.bf16.msra.mxu0 %v1675
          %1819 = vmatprep.subr.bf16.mxu0 %v1706
          %1820 = vmatpush2.bf16.msra.mxu0 %v1705
          %1821 = vmatprep.subr.bf16.mxu0 %v1704
          %1822 = vmatpush2.bf16.msra.mxu0 %v1703
          %1823 = vmatprep.subr.bf16.mxu0 %v1702
          %1824 = vmatpush2.bf16.msra.mxu0 %v1701
          %1825 = vmatprep.subr.bf16.mxu0 %v1700
          %1826 = vmatpush2.bf16.msra.mxu0 %v1699
          %1827 = vmatprep.subr.bf16.mxu0 %v1698
          %1828 = vmatpush2.bf16.msra.mxu0 %v1697
          %1829 = vmatprep.subr.bf16.mxu0 %v1696
          %1830 = vmatpush2.bf16.msra.mxu0 %v1695
          %1831 = vmatprep.subr.bf16.mxu0 %v1694
          %1832 = vmatpush2.bf16.msra.mxu0 %v1693
          %1833 = vmatprep.subr.bf16.mxu0 %v1692
          %1834 = vmatpush2.bf16.msra.mxu0 %v1691
          %1835 = vmatprep.mubr.bf16.mxu0 %v1404
          %1836 = vmatmul.mubr.bf16.gmra.mxu0 %v1403
          %v1837 = vpop.f32.mrf.mxu0
          %v1838 = vadd.f32 %v1476, %v1837
          %v1839 = vpop.f32.mrf.mxu0
          %v1840 = vadd.f32 %v1480, %v1839
          %v1841 = vpop.f32.mrf.mxu0
          %v1842 = vpop.f32.mrf.mxu0
          %1843 = vdwg.mxu0
          %1844 = vmatprep.subr.bf16.mxu0 %v1722
          %1845 = vmatpush1.bf16.msra.mxu0 %v1721
          %1846 = vmatprep.subr.bf16.mxu0 %v1720
          %1847 = vmatpush1.bf16.msra.mxu0 %v1719
          %1848 = vmatprep.subr.bf16.mxu0 %v1718
          %1849 = vmatpush1.bf16.msra.mxu0 %v1717
          %1850 = vmatprep.subr.bf16.mxu0 %v1716
          %1851 = vmatpush1.bf16.msra.mxu0 %v1715
          %1852 = vmatprep.subr.bf16.mxu0 %v1714
          %1853 = vmatpush1.bf16.msra.mxu0 %v1713
          %1854 = vmatprep.subr.bf16.mxu0 %v1712
          %1855 = vmatpush1.bf16.msra.mxu0 %v1711
          %1856 = vmatprep.subr.bf16.mxu0 %v1710
          %1857 = vmatpush1.bf16.msra.mxu0 %v1709
          %1858 = vmatprep.subr.bf16.mxu0 %v1708
          %1859 = vmatpush1.bf16.msra.mxu0 %v1707
          %1860 = vmatprep.subr.bf16.mxu0 %v1738
          %1861 = vmatpush2.bf16.msra.mxu0 %v1737
          %1862 = vmatprep.subr.bf16.mxu0 %v1736
          %1863 = vmatpush2.bf16.msra.mxu0 %v1735
          %1864 = vmatprep.subr.bf16.mxu0 %v1734
          %1865 = vmatpush2.bf16.msra.mxu0 %v1733
          %1866 = vmatprep.subr.bf16.mxu0 %v1732
          %1867 = vmatpush2.bf16.msra.mxu0 %v1731
          %1868 = vmatprep.subr.bf16.mxu0 %v1730
          %1869 = vmatpush2.bf16.msra.mxu0 %v1729
          %1870 = vmatprep.subr.bf16.mxu0 %v1728
          %1871 = vmatpush2.bf16.msra.mxu0 %v1727
          %1872 = vmatprep.subr.bf16.mxu0 %v1726
          %1873 = vmatpush2.bf16.msra.mxu0 %v1725
          %1874 = vmatprep.subr.bf16.mxu0 %v1724
          %1875 = vmatpush2.bf16.msra.mxu0 %v1723
          %1876 = vmatprep.mubr.bf16.mxu0 %v1406
          %1877 = vmatmul.mubr.bf16.gmra.mxu0 %v1405
          %v1878 = vpop.f32.mrf.mxu0
          %v1879 = vadd.f32 %v1838, %v1878
          %v1880 = vpop.f32.mrf.mxu0
          %v1881 = vadd.f32 %v1840, %v1880
          %v1882 = vpop.f32.mrf.mxu0
          %v1883 = vpop.f32.mrf.mxu0
          %1884 = vdwg.mxu0
          %vm1885 = vcmp.gt.f32.partialorder %v1879, 0.0
          %vm1886 = vcmp.gt.f32.partialorder %v1881, 0.0
          %v1887 = vmul.f32 %v1879, 0.2
          %v1888 = vmul.f32 %v1881, 0.2
          %v1889 = vsel %vm1885, %v1879, %v1887
          %v1890 = vsel %vm1886, %v1881, %v1888
          %v1891 = vpack.c.bf16 %v1889, %v1889
          %v1892 = vpack.c.bf16 %v1890, %v1890
          %v1893 = vld [vmem:[#allocation11] sm:$0xf]
          %v1894 = vld [vmem:[#allocation11 + $0x4] sm:$0xf]
          %v1895 = vld [vmem:[#allocation11 + $0x8] sm:$0xf]
          %v1896 = vld [vmem:[#allocation11 + $0xc] sm:$0xf]
          %v1897 = vld [vmem:[#allocation11 + $0x10] sm:$0xf]
          %v1898 = vld [vmem:[#allocation11 + $0x14] sm:$0xf]
          %v1899 = vld [vmem:[#allocation11 + $0x18] sm:$0xf]
          %v1900 = vld [vmem:[#allocation11 + $0x1c] sm:$0xf]
          %v1901 = vld [vmem:[#allocation11 + $0x20] sm:$0xf]
          %v1902 = vld [vmem:[#allocation11 + $0x24] sm:$0xf]
          %v1903 = vld [vmem:[#allocation11 + $0x28] sm:$0xf]
          %v1904 = vld [vmem:[#allocation11 + $0x2c] sm:$0xf]
          %v1905 = vld [vmem:[#allocation11 + $0x30] sm:$0xf]
          %v1906 = vld [vmem:[#allocation11 + $0x34] sm:$0xf]
          %v1907 = vld [vmem:[#allocation11 + $0x38] sm:$0xf]
          %v1908 = vld [vmem:[#allocation11 + $0x3c] sm:$0xf]
          %v1909 = vld [vmem:[#allocation11 + $0x40] sm:$0xf]
          %v1910 = vld [vmem:[#allocation11 + $0x44] sm:$0xf]
          %v1911 = vld [vmem:[#allocation11 + $0x48] sm:$0xf]
          %v1912 = vld [vmem:[#allocation11 + $0x4c] sm:$0xf]
          %v1913 = vld [vmem:[#allocation11 + $0x50] sm:$0xf]
          %v1914 = vld [vmem:[#allocation11 + $0x54] sm:$0xf]
          %v1915 = vld [vmem:[#allocation11 + $0x58] sm:$0xf]
          %v1916 = vld [vmem:[#allocation11 + $0x5c] sm:$0xf]
          %v1917 = vld [vmem:[#allocation11 + $0x60] sm:$0xf]
          %v1918 = vld [vmem:[#allocation11 + $0x64] sm:$0xf]
          %v1919 = vld [vmem:[#allocation11 + $0x68] sm:$0xf]
          %v1920 = vld [vmem:[#allocation11 + $0x6c] sm:$0xf]
          %v1921 = vld [vmem:[#allocation11 + $0x70] sm:$0xf]
          %v1922 = vld [vmem:[#allocation11 + $0x74] sm:$0xf]
          %v1923 = vld [vmem:[#allocation11 + $0x78] sm:$0xf]
          %v1924 = vld [vmem:[#allocation11 + $0x7c] sm:$0xf]
          %v1925 = vld [vmem:[%s6] sm:$0x1]
          %v1927 = vlaneseq
          %v1928 = vshrl.u32 %v1927, 7
          %v1929 = vsub.s32 0, %v1928
          %v1930 = vrot.slane %v1925, %v1929
          %v1964 = vunpack.c.l.b16 %v1893
          %v1965 = vunpack.c.l.b16 %v1894
          %v1966 = vunpack.c.l.b16 %v1895
          %v1967 = vunpack.c.l.b16 %v1896
          %v1968 = vunpack.c.l.b16 %v1897
          %v1969 = vunpack.c.l.b16 %v1898
          %v1970 = vunpack.c.l.b16 %v1899
          %v1971 = vunpack.c.l.b16 %v1900
          %v1972 = vunpack.c.l.b16 %v1901
          %v1973 = vunpack.c.l.b16 %v1902
          %v1974 = vunpack.c.l.b16 %v1903
          %v1975 = vunpack.c.l.b16 %v1904
          %v1976 = vunpack.c.l.b16 %v1905
          %v1977 = vunpack.c.l.b16 %v1906
          %v1978 = vunpack.c.l.b16 %v1907
          %v1979 = vunpack.c.l.b16 %v1908
          %v1980 = vunpack.c.l.b16 %v1909
          %v1981 = vunpack.c.l.b16 %v1910
          %v1982 = vunpack.c.l.b16 %v1911
          %v1983 = vunpack.c.l.b16 %v1912
          %v1984 = vunpack.c.l.b16 %v1913
          %v1985 = vunpack.c.l.b16 %v1914
          %v1986 = vunpack.c.l.b16 %v1915
          %v1987 = vunpack.c.l.b16 %v1916
          %v1988 = vunpack.c.l.b16 %v1917
          %v1989 = vunpack.c.l.b16 %v1918
          %v1990 = vunpack.c.l.b16 %v1919
          %v1991 = vunpack.c.l.b16 %v1920
          %v1992 = vunpack.c.l.b16 %v1921
          %v1993 = vunpack.c.l.b16 %v1922
          %v1994 = vunpack.c.l.b16 %v1923
          %v1995 = vunpack.c.l.b16 %v1924
          %v1996 = vpack.c.b16 %v1965, %v1964
          %v1997 = vpack.c.b16 %v1967, %v1966
          %v1998 = vpack.c.b16 %v1969, %v1968
          %v1999 = vpack.c.b16 %v1971, %v1970
          %v2000 = vpack.c.b16 %v1973, %v1972
          %v2001 = vpack.c.b16 %v1975, %v1974
          %v2002 = vpack.c.b16 %v1977, %v1976
          %v2003 = vpack.c.b16 %v1979, %v1978
          %v2004 = vpack.c.b16 %v1981, %v1980
          %v2005 = vpack.c.b16 %v1983, %v1982
          %v2006 = vpack.c.b16 %v1985, %v1984
          %v2007 = vpack.c.b16 %v1987, %v1986
          %v2008 = vpack.c.b16 %v1989, %v1988
          %v2009 = vpack.c.b16 %v1991, %v1990
          %v2010 = vpack.c.b16 %v1993, %v1992
          %v2011 = vpack.c.b16 %v1995, %v1994
          %2028 = vmatprep.subr.bf16.mxu0 0
          %2029 = vmatpush1.bf16.msra.mxu0 %v2003
          %2030 = vmatprep.subr.bf16.mxu0 0
          %2031 = vmatpush1.bf16.msra.mxu0 %v2002
          %2032 = vmatprep.subr.bf16.mxu0 0
          %2033 = vmatpush1.bf16.msra.mxu0 %v2001
          %2034 = vmatprep.subr.bf16.mxu0 0
          %2035 = vmatpush1.bf16.msra.mxu0 %v2000
          %2036 = vmatprep.subr.bf16.mxu0 0
          %2037 = vmatpush1.bf16.msra.mxu0 %v1999
          %2038 = vmatprep.subr.bf16.mxu0 0
          %2039 = vmatpush1.bf16.msra.mxu0 %v1998
          %2040 = vmatprep.subr.bf16.mxu0 0
          %2041 = vmatpush1.bf16.msra.mxu0 %v1997
          %2042 = vmatprep.subr.bf16.mxu0 0
          %2043 = vmatpush1.bf16.msra.mxu0 %v1996
          %2044 = vmatprep.subr.bf16.mxu0 0
          %2045 = vmatpush2.bf16.msra.mxu0 %v2011
          %2046 = vmatprep.subr.bf16.mxu0 0
          %2047 = vmatpush2.bf16.msra.mxu0 %v2010
          %2048 = vmatprep.subr.bf16.mxu0 0
          %2049 = vmatpush2.bf16.msra.mxu0 %v2009
          %2050 = vmatprep.subr.bf16.mxu0 0
          %2051 = vmatpush2.bf16.msra.mxu0 %v2008
          %2052 = vmatprep.subr.bf16.mxu0 0
          %2053 = vmatpush2.bf16.msra.mxu0 %v2007
          %2054 = vmatprep.subr.bf16.mxu0 0
          %2055 = vmatpush2.bf16.msra.mxu0 %v2006
          %2056 = vmatprep.subr.bf16.mxu0 0
          %2057 = vmatpush2.bf16.msra.mxu0 %v2005
          %2058 = vmatprep.subr.bf16.mxu0 0
          %2059 = vmatpush2.bf16.msra.mxu0 %v2004
          %2060 = vmatprep.mubr.bf16.mxu0 %v1892
          %2061 = vmatmul.mubr.bf16.gmra.mxu0 %v1891
          %v2062 = vpop.f32.mrf.mxu0
          %v2063 = vadd.f32 %v1930, %v2062
          %v2064 = vpop.f32.mrf.mxu0
          %v2065 = vpop.f32.mrf.mxu0
          %v2066 = vpop.f32.mrf.mxu0
          %2067 = vdwg.mxu0
          %2068 = vst [vmem:[#allocation12] sm:$0xff] %v2063
        $region76: #{tpu_custom_call.1} parent=47 // pred_fallthru
          _
        // Predicated region
        $region77: #{tpu_custom_call.1} parent=47 // pred_check
          %p2069 = pneg %p215
        $region78: #{tpu_custom_call.1} parent=47 // pred_check_branch
          %2071 = sbr.rel (%p2069) target = $region80
        $region79: #{tpu_custom_call.1} parent=47 // pred_region
          %s2073 = ssub.s32 128, 128
          %2074 = vsyncadd [#allocation5], %s2073
          %s2075 = smul.addr %s30, 128
          %s2076 = scalar_lea.hbm %s7, %s2075
          %s2078 = sshll.u32 [#allocation12], 4
          %s2079 = int_to_ptr.vmem [resolvable:$true] %s2078
          %2081 = dma.vmem_to_hbm [thread:$0]  %s2079, 128, %s2076, [#allocation5]
        $region80: #{tpu_custom_call.1} parent=47 // pred_fallthru
          _
        // Predicated region
        $region81: #{tpu_custom_call.1} parent=47 // pred_check
          %p2082 = pneg %p215
        $region82: #{tpu_custom_call.1} parent=47 // pred_check_branch
          %2084 = sbr.rel (%p2082) target = $region84
        $region83: #{tpu_custom_call.1} parent=47 // pred_region
          %2085 = dma.done [#allocation5], 128
        $region84: #{tpu_custom_call.1} parent=47 // pred_fallthru
          _
      $region48: #{tpu_custom_call.1} parent=5 // pred_fallthru
        _
      %p2086 = scmp.le.s32.totalorder 2, %s21
      // Predicated region
      $region85: #{tpu_custom_call.1} parent=5 // pred_check
        %p2087 = pneg %p2086
      $region86: #{tpu_custom_call.1} parent=5 // pred_check_branch
        %2089 = sbr.rel (%p2087) target = $region88
      $region87: #{tpu_custom_call.1} parent=5 // pred_region
        %s2090 = ssub.s32 %s21, 2
      $region88: #{tpu_custom_call.1} parent=5 // pred_fallthru
        _
    $region6: #{tpu_custom_call.1} parent=1 // loop_footer
      %s25 = sadd.s32 1, %s21
    $region7: #{tpu_custom_call.1} parent=1 // loop_footer_branch
      %20 = sbr.rel target = $region3
    $region8: #{tpu_custom_call.1} parent=1 // loop_exit
      _
    %2091 = vsyncpa [#allocation4], 1
    %s2092 = scalar_lea.sflag [#allocation4], 1
    %2093 = vsyncpa %s2092, 1
    %2094 = vsyncpa [#allocation7], 1
    %s2095 = scalar_lea.sflag [#allocation7], 1
    %2096 = vsyncpa %s2095, 1
    %2097 = vsyncpa [#allocation10], 1
    %2098 = vsyncpa [#allocation5], 1
    %s2099 = scalar_lea.sflag [#allocation5], 1
    %2100 = vsyncpa %s2099, 1

</llo_original>
